<compile_context>
chip_gen: v7x
topology: tpu7x:2x2x1
jax: 0.10.0
libtpu: 0.0.40
codegen_flags: <defaults>
</compile_context>

<pallas_src>
import math
import jax
import jax.numpy as jnp
from jax import lax
from jax.experimental import pallas as pl
from jax.experimental.pallas import tpu as pltpu


# ----------------------------------------------------------------------------
# Fused per-layer Pallas kernel (one batch element per grid step)
# ----------------------------------------------------------------------------

def cossm_layer_kernel(x_ref, wres_ref, bnsh_ref, w_in_ref, cw_ref, cb_ref,
                       w_dtbc_ref, bdt_ref, aneg_ref, dres_ref, wout_ref,
                       gamma_ref, beta_ref, o_ref,
                       xpad_ref, xcpad_ref, da_ref, dbu_ref, ce_ref):
    """ResBlock -> Mamba (both streams fused) -> res + LayerNorm(mamba_out)."""
    f32 = jnp.float32
    bf16 = jnp.bfloat16

    L, Cin2 = x_ref.shape                      # block is one batch element
    D2, Cout2 = wout_ref.shape                 # 2*d_inner, 2*d_model
    d_inner = D2 // 2
    cout = Cout2 // 2
    N = aneg_ref.shape[0]                      # d_state
    d_conv = cw_ref.shape[0]

    # ---- ResBlock: Conv1d(k=3, pad=1) [BN scale folded] + ReLU + skip, as ONE
    #      matmul against [conv_scaled | skip] columns.  Shifted taps come from
    #      a zero-padded VMEM scratch (no zero-row concat copies).
    xpad_ref[...] = jnp.zeros_like(xpad_ref)
    xpad_ref[1:L + 1, :] = x_ref[...]
    x_stack = jnp.concatenate(
        [xpad_ref[0:L, :], x_ref[...], xpad_ref[2:L + 2, :]], axis=-1)
    y2 = jnp.dot(x_stack, wres_ref[...], preferred_element_type=f32)   # (L, 2*Cout2)
    res = jnp.maximum(y2[:, :Cout2] + bnsh_ref[...], 0.0) + y2[:, Cout2:]

    # ---- Mamba in-projection (block-diagonal over streams): [xs | z]
    xz = jnp.dot(res.astype(bf16), w_in_ref[...], preferred_element_type=f32)
    xs = xz[:, :D2]                                                    # (L, D2)
    z = xz[:, D2:]                                                     # (L, D2)

    # ---- causal depthwise conv (kernel d_conv, left pad) via padded scratch,
    #      then SiLU.
    xcpad_ref[...] = jnp.zeros_like(xcpad_ref)
    xcpad_ref[d_conv - 1:, :] = xs
    xc = xs * cw_ref[d_conv - 1:d_conv, :]
    for k in range(d_conv - 1):
        xc = xc + xcpad_ref[k:k + L, :] * cw_ref[k:k + 1, :]
    xc = xc + cb_ref[...]
    xc = xc * jax.nn.sigmoid(xc)                                       # (L, D2)

    # ---- dt / B / C projections in ONE matmul (low-rank dt proj folded offline)
    proj = jnp.dot(xc.astype(bf16), w_dtbc_ref[...], preferred_element_type=f32)
    dt = jax.nn.softplus(proj[:, :D2] + bdt_ref[...])                  # (L, D2)

    # ---- scan prologue -> VMEM scratch.  Stream (g vs r) selection is a lane
    #      mask instead of 64-lane slice + concat.
    gsel = lax.broadcasted_iota(jnp.int32, (L, N, D2), 2) < d_inner
    bc = proj[:, D2:].reshape(L, 4 * N, 1)                             # d_state -> sublanes
    full3 = (L, N, D2)
    b_sel = jnp.where(gsel, jnp.broadcast_to(bc[:, 0:N], full3),
                      jnp.broadcast_to(bc[:, N:2 * N], full3))
    c_sel = jnp.where(gsel, jnp.broadcast_to(bc[:, 2 * N:3 * N], full3),
                      jnp.broadcast_to(bc[:, 3 * N:4 * N], full3))
    da_ref[...] = jnp.exp(dt[:, None, :] * aneg_ref[...][None])        # (L, N, D2)
    dbu_ref[...] = b_sel * (dt * xc)[:, None, :]                       # (L, N, D2)
    ce_ref[...] = c_sel                                                # (L, N, D2)

    # ---- serial recurrence with the C-reduction fused into every step
    #      (no (L, N, D2) hidden-state history is ever materialized).
    l_iota = lax.broadcasted_iota(jnp.int32, (L, 1), 0)

    def step(l, carry):
        h, y_acc = carry
        h = da_ref[l] * h + dbu_ref[l]                                 # (N, D2)
        y_l = jnp.sum(h * ce_ref[l], axis=0, keepdims=True)            # (1, D2)
        y_acc = y_acc + jnp.where(l_iota == l, y_l, 0.0)
        return h, y_acc

    _, y = lax.fori_loop(
        0, L, step,
        (jnp.zeros((N, D2), f32), jnp.zeros((L, D2), f32)),
        unroll=True)

    # ---- D residual, SiLU gate, out projection
    y = (y + dres_ref[...] * xc) * (z * jax.nn.sigmoid(z))             # (L, D2)
    out = jnp.dot(y.astype(bf16), wout_ref[...], preferred_element_type=f32)

    # ---- per-stream LayerNorm (eps=1e-6) via lane-mask reductions, then the
    #      residual add with the ResBlock output.
    osel = lax.broadcasted_iota(jnp.int32, (1, Cout2), 1) < cout

    def stream_mean(v):
        sg = jnp.sum(jnp.where(osel, v, 0.0), axis=-1, keepdims=True)
        sr = jnp.sum(jnp.where(osel, 0.0, v), axis=-1, keepdims=True)
        return jnp.where(osel, sg, sr) * (1.0 / cout)

    mu = stream_mean(out)
    dlt = out - mu
    var = stream_mean(dlt * dlt)
    yn = dlt * lax.rsqrt(var + 1e-6)
    o_ref[...] = (res + yn * gamma_ref[...] + beta_ref[...]).astype(o_ref.dtype)


# ----------------------------------------------------------------------------
# pallas_call wrapper: grid over batch, all weights resident, scratch in VMEM
# ----------------------------------------------------------------------------

def cossm_layer(x, p):
    B, L, Cin2 = x.shape
    D2, Cout2 = p["w_out"].shape
    N = p["a_neg"].shape[0]
    d_conv = p["conv_w"].shape[0]

    def full_spec(a):
        return pl.BlockSpec(a.shape, lambda b: (0,) * a.ndim)

    grid_spec = pltpu.PrefetchScalarGridSpec(
        num_scalar_prefetch=0,
        grid=(B,),
        in_specs=[
            pl.BlockSpec((None, L, Cin2), lambda b: (b, 0, 0)),
            full_spec(p["w_res"]), full_spec(p["bn_shift"]),
            full_spec(p["w_in"]), full_spec(p["conv_w"]),
            full_spec(p["conv_b"]), full_spec(p["w_dtbc"]),
            full_spec(p["b_dt"]), full_spec(p["a_neg"]),
            full_spec(p["d_res"]), full_spec(p["w_out"]),
            full_spec(p["gamma"]), full_spec(p["beta"]),
        ],
        out_specs=pl.BlockSpec((None, L, Cout2), lambda b: (b, 0, 0)),
        scratch_shapes=[
            pltpu.VMEM((L + 2, Cin2), jnp.bfloat16),        # padded k=3 conv taps
            pltpu.VMEM((L + d_conv - 1, D2), jnp.float32),  # padded causal-conv taps
            pltpu.VMEM((L, N, D2), jnp.float32),            # dA
            pltpu.VMEM((L, N, D2), jnp.float32),            # dB * u
            pltpu.VMEM((L, N, D2), jnp.float32),            # C (stream-selected)
        ],
    )
    return pl.pallas_call(
        cossm_layer_kernel,
        grid_spec=grid_spec,
        out_shape=jax.ShapeDtypeStruct((B, L, Cout2), jnp.bfloat16),
        compiler_params=pltpu.CompilerParams(
            dimension_semantics=("parallel",)),
    )(x, p["w_res"], p["bn_shift"], p["w_in"], p["conv_w"], p["conv_b"],
      p["w_dtbc"], p["b_dt"], p["a_neg"], p["d_res"], p["w_out"],
      p["gamma"], p["beta"])


def cossm_forward(params, g_x, r_x):
    # Both streams ride together as [g | r] channels; bf16 between layers.
    x = jnp.concatenate([g_x, r_x], axis=-1).astype(jnp.bfloat16)
    for lp in params["layers"]:
        x = cossm_layer(x, lp)
    c = x.shape[-1] // 2
    return x[..., :c].astype(jnp.float32), x[..., c:].astype(jnp.float32)


# ----------------------------------------------------------------------------
# Deterministic parameter construction (per-stream params, fused offline)
# ----------------------------------------------------------------------------

class KeyGen:
    def __init__(self, key):
        self.key = key

    def __call__(self):
        self.key, sub = jax.random.split(self.key)
        return sub


def _nrm(kg, shape, scale):
    return scale * jax.random.normal(kg(), shape, jnp.float32)


def _block_diag(a, b):
    r1, c1 = a.shape
    r2, c2 = b.shape
    top = jnp.concatenate([a, jnp.zeros((r1, c2), jnp.float32)], axis=1)
    bot = jnp.concatenate([jnp.zeros((r2, c1), jnp.float32), b], axis=1)
    return jnp.concatenate([top, bot], axis=0)


def init_layer(kg, cin, cout, d_state, d_conv, expand):
    d_model = cout
    d_inner = expand * d_model
    dt_rank = math.ceil(d_model / 16)
    bf = jnp.bfloat16

    def res_branch():
        w3 = _nrm(kg, (3, cin, cout), math.sqrt(2.0 / (3 * cin + cout)))
        wskip = (jnp.eye(cin, dtype=jnp.float32) if cin == cout
                 else _nrm(kg, (cin, cout), math.sqrt(2.0 / (cin + cout))))
        gamma = 1.0 + 0.1 * jax.random.normal(kg(), (cout,), jnp.float32)
        beta = 0.1 * jax.random.normal(kg(), (cout,), jnp.float32)
        rmean = 0.1 * jax.random.normal(kg(), (cout,), jnp.float32)
        rvar = 1.0 + 0.1 * jax.random.uniform(kg(), (cout,), jnp.float32)
        scale = gamma / jnp.sqrt(rvar + 1e-5)      # folded eval-mode BatchNorm
        shift = beta - rmean * scale
        return w3, wskip, scale, shift

    def mamba():
        s_in = 1.0 / math.sqrt(d_model)
        s_x = 1.0 / math.sqrt(d_inner)
        w_x = _nrm(kg, (d_model, d_inner), s_in)
        w_z = _nrm(kg, (d_model, d_inner), s_in)
        conv_w = _nrm(kg, (d_conv, d_inner), 1.0 / math.sqrt(d_conv))
        conv_b = _nrm(kg, (d_inner,), 0.02)
        w_dt_in = _nrm(kg, (d_inner, dt_rank), s_x)
        w_B = _nrm(kg, (d_inner, d_state), s_x)
        w_C = _nrm(kg, (d_inner, d_state), s_x)
        w_dtproj = _nrm(kg, (dt_rank, d_inner), 1.0 / math.sqrt(dt_rank))
        dtv = jnp.exp(jax.random.uniform(kg(), (d_inner,), jnp.float32)
                      * (math.log(0.1) - math.log(0.001)) + math.log(0.001))
        b_dt = dtv + jnp.log(-jnp.expm1(-dtv))     # inverse softplus
        A_log = jnp.log(jnp.broadcast_to(
            jnp.arange(1, d_state + 1, dtype=jnp.float32)[:, None],
            (d_state, d_inner)))
        return dict(w_x=w_x, w_z=w_z, conv_w=conv_w, conv_b=conv_b,
                    w_dt=w_dt_in @ w_dtproj,       # low-rank dt proj folded offline
                    w_B=w_B, w_C=w_C, b_dt=b_dt,
                    a_neg=-jnp.exp(A_log),         # A = -exp(A_log) precomputed
                    d_res=jnp.ones((d_inner,), jnp.float32),
                    w_out=_nrm(kg, (d_inner, d_model), s_x))

    def norm():
        gamma = 1.0 + 0.05 * jax.random.normal(kg(), (d_model,), jnp.float32)
        beta = 0.05 * jax.random.normal(kg(), (d_model,), jnp.float32)
        return gamma, beta

    rg = res_branch()   # stream g uses the e_* net
    rr = res_branch()   # stream r uses the g_* net
    mg = mamba()        # mamna_g
    mr = mamba()        # mamna_r
    ng = norm()         # norm1 (g)
    nr = norm()         # norm2 (r)

    bd = _block_diag
    # Fused ResBlock weight: [conv(k=3) with BN scale folded | skip(1x1)].
    # Skip columns live only on the center-tap rows.
    scale2 = jnp.concatenate([rg[2], rr[2]])
    skip2 = bd(rg[1], rr[1])
    zero2 = jnp.zeros_like(skip2)
    taps = []
    for t in range(3):
        conv_t = bd(rg[0][t], rr[0][t]) * scale2[None, :]
        taps.append(jnp.concatenate([conv_t, skip2 if t == 1 else zero2], axis=1))
    w_res = jnp.concatenate(taps, axis=0).astype(bf)       # (3*2cin, 2*2cout)

    return dict(
        w_res=w_res,
        bn_shift=jnp.concatenate([rg[3], rr[3]])[None, :],
        w_in=jnp.concatenate([bd(mg["w_x"], mr["w_x"]),
                              bd(mg["w_z"], mr["w_z"])], axis=1).astype(bf),
        conv_w=jnp.concatenate([mg["conv_w"], mr["conv_w"]], axis=1),
        conv_b=jnp.concatenate([mg["conv_b"], mr["conv_b"]])[None, :],
        w_dtbc=jnp.concatenate([bd(mg["w_dt"], mr["w_dt"]),
                                bd(mg["w_B"], mr["w_B"]),
                                bd(mg["w_C"], mr["w_C"])], axis=1).astype(bf),
        b_dt=jnp.concatenate([mg["b_dt"], mr["b_dt"]])[None, :],
        a_neg=jnp.concatenate([mg["a_neg"], mr["a_neg"]], axis=1),
        d_res=jnp.concatenate([mg["d_res"], mr["d_res"]])[None, :],
        w_out=bd(mg["w_out"], mr["w_out"]).astype(bf),      # (2*d_inner, 2*d_model)
        gamma=jnp.concatenate([ng[0], nr[0]])[None, :],
        beta=jnp.concatenate([ng[1], nr[1]])[None, :],
    )


def init_cossm(key, input_size, output_sizes, d_state=8, d_conv=4, expand=2):
    kg = KeyGen(key)
    layers = []
    cin = input_size
    for cout in output_sizes:
        layers.append(init_layer(kg, cin, cout, d_state, d_conv, expand))
        cin = cout
    return dict(layers=layers)


# ----------------------------------------------------------------------------
# Main
# ----------------------------------------------------------------------------

if __name__ == "__main__":
    B, L, C_IN = 2, 8, 4
    OUTPUT_SIZES = [32]

    key = jax.random.PRNGKey(0)
    k_params, k_g, k_r = jax.random.split(key, 3)

    params = init_cossm(k_params, C_IN, OUTPUT_SIZES)
    g_x = jax.random.normal(k_g, (B, L, C_IN), jnp.float32)
    r_x = jax.random.normal(k_r, (B, L, C_IN), jnp.float32)

    g_out, r_out = jax.jit(cossm_forward)(params, g_x, r_x)
    jax.block_until_ready((g_out, r_out))

    assert g_out.shape == (B, L, OUTPUT_SIZES[-1])
    assert r_out.shape == (B, L, OUTPUT_SIZES[-1])
    assert bool(jnp.all(jnp.isfinite(g_out))) and bool(jnp.all(jnp.isfinite(r_out)))
    print("KERNEL_OK")
</pallas_src>

<mosaic_0001>
module attributes {stable_mosaic.version = 11 : i64} {
  func.func @cossm_layer_kernel(%arg0: i32, %arg1: memref<1x8x8xbf16, #tpu.memory_space<vmem>>, %arg2: memref<24x128xbf16, #tpu.memory_space<vmem>>, %arg3: memref<1x64xf32, #tpu.memory_space<vmem>>, %arg4: memref<64x256xbf16, #tpu.memory_space<vmem>>, %arg5: memref<4x128xf32, #tpu.memory_space<vmem>>, %arg6: memref<1x128xf32, #tpu.memory_space<vmem>>, %arg7: memref<128x160xbf16, #tpu.memory_space<vmem>>, %arg8: memref<1x128xf32, #tpu.memory_space<vmem>>, %arg9: memref<8x128xf32, #tpu.memory_space<vmem>>, %arg10: memref<1x128xf32, #tpu.memory_space<vmem>>, %arg11: memref<128x64xbf16, #tpu.memory_space<vmem>>, %arg12: memref<1x64xf32, #tpu.memory_space<vmem>>, %arg13: memref<1x64xf32, #tpu.memory_space<vmem>>, %arg14: memref<1x8x64xbf16, #tpu.memory_space<vmem>>, %arg15: memref<10x8xbf16, #tpu.memory_space<vmem>>, %arg16: memref<11x128xf32, #tpu.memory_space<vmem>>, %arg17: memref<8x8x128xf32, #tpu.memory_space<vmem>>, %arg18: memref<8x8x128xf32, #tpu.memory_space<vmem>>, %arg19: memref<8x8x128xf32, #tpu.memory_space<vmem>>) attributes {dimension_semantics = [#tpu.dimension_semantics<parallel>], iteration_bounds = array<i64: 2>, scalar_prefetch = 0 : i64, scratch_operands = 5 : i64, tpu.core_type = #tpu.core_type<tc>, window_params = [{transform_indices = @transform_0, window_bounds = array<i64: 1, 8, 8>}, {pipeline_mode = #tpu.pipeline_mode<synchronous>, transform_indices = @transform_1, window_bounds = array<i64: 24, 128>}, {pipeline_mode = #tpu.pipeline_mode<synchronous>, transform_indices = @transform_2, window_bounds = array<i64: 1, 64>}, {pipeline_mode = #tpu.pipeline_mode<synchronous>, transform_indices = @transform_3, window_bounds = array<i64: 64, 256>}, {pipeline_mode = #tpu.pipeline_mode<synchronous>, transform_indices = @transform_4, window_bounds = array<i64: 4, 128>}, {pipeline_mode = #tpu.pipeline_mode<synchronous>, transform_indices = @transform_5, window_bounds = array<i64: 1, 128>}, {pipeline_mode = #tpu.pipeline_mode<synchronous>, transform_indices = @transform_6, window_bounds = array<i64: 128, 160>}, {pipeline_mode = #tpu.pipeline_mode<synchronous>, transform_indices = @transform_7, window_bounds = array<i64: 1, 128>}, {pipeline_mode = #tpu.pipeline_mode<synchronous>, transform_indices = @transform_8, window_bounds = array<i64: 8, 128>}, {pipeline_mode = #tpu.pipeline_mode<synchronous>, transform_indices = @transform_9, window_bounds = array<i64: 1, 128>}, {pipeline_mode = #tpu.pipeline_mode<synchronous>, transform_indices = @transform_10, window_bounds = array<i64: 128, 64>}, {pipeline_mode = #tpu.pipeline_mode<synchronous>, transform_indices = @transform_11, window_bounds = array<i64: 1, 64>}, {pipeline_mode = #tpu.pipeline_mode<synchronous>, transform_indices = @transform_12, window_bounds = array<i64: 1, 64>}, {transform_indices = @transform_13, window_bounds = array<i64: 1, 8, 64>}]} {
    %cst = arith.constant 0.000000e+00 : bf16
    %0 = vector.broadcast %cst : bf16 to vector<10x8xbf16>
    %c0 = arith.constant 0 : index
    %c0_0 = arith.constant 0 : index
    %1 = vector.load %arg15[%c0, %c0_0] : memref<10x8xbf16, #tpu.memory_space<vmem>>, vector<10x8xbf16>
    tpu.vector_store %arg15[%c0, %c0_0], %0 {strides = array<i32>} : memref<10x8xbf16, #tpu.memory_space<vmem>>, vector<10x8xbf16>,
    %c0_1 = arith.constant 0 : index
    %c0_2 = arith.constant 0 : index
    %c0_3 = arith.constant 0 : index
    %2 = vector.load %arg1[%c0_1, %c0_2, %c0_3] : memref<1x8x8xbf16, #tpu.memory_space<vmem>>, vector<1x8x8xbf16>
    %3 = vector.shape_cast %2 : vector<1x8x8xbf16> to vector<8x8xbf16>
    %c1 = arith.constant 1 : index
    %c0_4 = arith.constant 0 : index
    %4 = vector.load %arg15[%c1, %c0_4] : memref<10x8xbf16, #tpu.memory_space<vmem>>, vector<8x8xbf16>
    tpu.vector_store %arg15[%c1, %c0_4], %3 {strides = array<i32>} : memref<10x8xbf16, #tpu.memory_space<vmem>>, vector<8x8xbf16>,
    %c0_5 = arith.constant 0 : index
    %c0_6 = arith.constant 0 : index
    %5 = vector.load %arg15[%c0_5, %c0_6] : memref<10x8xbf16, #tpu.memory_space<vmem>>, vector<8x8xbf16>
    %c0_7 = arith.constant 0 : index
    %c0_8 = arith.constant 0 : index
    %c0_9 = arith.constant 0 : index
    %6 = vector.load %arg1[%c0_7, %c0_8, %c0_9] : memref<1x8x8xbf16, #tpu.memory_space<vmem>>, vector<1x8x8xbf16>
    %7 = vector.shape_cast %6 : vector<1x8x8xbf16> to vector<8x8xbf16>
    %c2 = arith.constant 2 : index
    %c0_10 = arith.constant 0 : index
    %8 = vector.load %arg15[%c2, %c0_10] : memref<10x8xbf16, #tpu.memory_space<vmem>>, vector<8x8xbf16>
    %9 = tpu.concatenate %5, %7, %8 in 1 : vector<8x8xbf16>, vector<8x8xbf16>, vector<8x8xbf16> -> vector<8x24xbf16>
    %c0_11 = arith.constant 0 : index
    %c0_12 = arith.constant 0 : index
    %10 = vector.load %arg2[%c0_11, %c0_12] : memref<24x128xbf16, #tpu.memory_space<vmem>>, vector<24x128xbf16>
    %cst_13 = arith.constant dense<0.000000e+00> : vector<8x128xf32>
    %11 = tpu.matmul %9, %10, %cst_13 {dimension_numbers = #tpu.dot_dimension_numbers<[1], [0], [0], [1], [0, 0, 1, 1], [], []>} : vector<8x24xbf16>, vector<24x128xbf16>, vector<8x128xf32> -> vector<8x128xf32>
    %12 = vector.extract_strided_slice %11 {offsets = [0, 0], sizes = [8, 64], strides = [1, 1]} : vector<8x128xf32> to vector<8x64xf32>
    %c0_14 = arith.constant 0 : index
    %c0_15 = arith.constant 0 : index
    %13 = vector.load %arg3[%c0_14, %c0_15] : memref<1x64xf32, #tpu.memory_space<vmem>>, vector<1x64xf32>
    %14 = vector.broadcast %13 : vector<1x64xf32> to vector<8x64xf32>
    %15 = arith.addf %12, %14 : vector<8x64xf32>
    %cst_16 = arith.constant 0.000000e+00 : f32
    %16 = vector.broadcast %cst_16 : f32 to vector<8x64xf32>
    %17 = arith.maximumf %15, %16 : vector<8x64xf32>
    %18 = vector.extract_strided_slice %11 {offsets = [0, 64], sizes = [8, 64], strides = [1, 1]} : vector<8x128xf32> to vector<8x64xf32>
    %19 = arith.addf %17, %18 : vector<8x64xf32>
    %20 = arith.truncf %19 : vector<8x64xf32> to vector<8x64xbf16>
    %c0_17 = arith.constant 0 : index
    %c0_18 = arith.constant 0 : index
    %21 = vector.load %arg4[%c0_17, %c0_18] : memref<64x256xbf16, #tpu.memory_space<vmem>>, vector<64x256xbf16>
    %cst_19 = arith.constant dense<0.000000e+00> : vector<8x256xf32>
    %22 = tpu.matmul %20, %21, %cst_19 {dimension_numbers = #tpu.dot_dimension_numbers<[1], [0], [0], [1], [0, 0, 1, 1], [], []>} : vector<8x64xbf16>, vector<64x256xbf16>, vector<8x256xf32> -> vector<8x256xf32>
    %23 = vector.extract_strided_slice %22 {offsets = [0, 0], sizes = [8, 128], strides = [1, 1]} : vector<8x256xf32> to vector<8x128xf32>
    %24 = vector.extract_strided_slice %22 {offsets = [0, 128], sizes = [8, 128], strides = [1, 1]} : vector<8x256xf32> to vector<8x128xf32>
    %cst_20 = arith.constant 0.000000e+00 : f32
    %25 = vector.broadcast %cst_20 : f32 to vector<11x128xf32>
    %c0_21 = arith.constant 0 : index
    %c0_22 = arith.constant 0 : index
    %26 = vector.load %arg16[%c0_21, %c0_22] : memref<11x128xf32, #tpu.memory_space<vmem>>, vector<11x128xf32>
    tpu.vector_store %arg16[%c0_21, %c0_22], %25 {strides = array<i32>} : memref<11x128xf32, #tpu.memory_space<vmem>>, vector<11x128xf32>,
    %c3 = arith.constant 3 : index
    %c0_23 = arith.constant 0 : index
    %27 = vector.load %arg16[%c3, %c0_23] : memref<11x128xf32, #tpu.memory_space<vmem>>, vector<8x128xf32>
    tpu.vector_store %arg16[%c3, %c0_23], %23 {strides = array<i32>} : memref<11x128xf32, #tpu.memory_space<vmem>>, vector<8x128xf32>,
    %c3_24 = arith.constant 3 : index
    %c0_25 = arith.constant 0 : index
    %28 = vector.load %arg5[%c3_24, %c0_25] : memref<4x128xf32, #tpu.memory_space<vmem>>, vector<1x128xf32>
    %29 = vector.broadcast %28 : vector<1x128xf32> to vector<8x128xf32>
    %30 = arith.mulf %23, %29 : vector<8x128xf32>
    %c0_26 = arith.constant 0 : index
    %c0_27 = arith.constant 0 : index
    %31 = vector.load %arg16[%c0_26, %c0_27] : memref<11x128xf32, #tpu.memory_space<vmem>>, vector<8x128xf32>
    %c0_28 = arith.constant 0 : index
    %c0_29 = arith.constant 0 : index
    %32 = vector.load %arg5[%c0_28, %c0_29] : memref<4x128xf32, #tpu.memory_space<vmem>>, vector<1x128xf32>
    %33 = vector.broadcast %32 : vector<1x128xf32> to vector<8x128xf32>
    %34 = arith.mulf %31, %33 : vector<8x128xf32>
    %35 = arith.addf %30, %34 : vector<8x128xf32>
    %c1_30 = arith.constant 1 : index
    %c0_31 = arith.constant 0 : index
    %36 = vector.load %arg16[%c1_30, %c0_31] : memref<11x128xf32, #tpu.memory_space<vmem>>, vector<8x128xf32>
    %c1_32 = arith.constant 1 : index
    %c0_33 = arith.constant 0 : index
    %37 = vector.load %arg5[%c1_32, %c0_33] : memref<4x128xf32, #tpu.memory_space<vmem>>, vector<1x128xf32>
    %38 = vector.broadcast %37 : vector<1x128xf32> to vector<8x128xf32>
    %39 = arith.mulf %36, %38 : vector<8x128xf32>
    %40 = arith.addf %35, %39 : vector<8x128xf32>
    %c2_34 = arith.constant 2 : index
    %c0_35 = arith.constant 0 : index
    %41 = vector.load %arg16[%c2_34, %c0_35] : memref<11x128xf32, #tpu.memory_space<vmem>>, vector<8x128xf32>
    %c2_36 = arith.constant 2 : index
    %c0_37 = arith.constant 0 : index
    %42 = vector.load %arg5[%c2_36, %c0_37] : memref<4x128xf32, #tpu.memory_space<vmem>>, vector<1x128xf32>
    %43 = vector.broadcast %42 : vector<1x128xf32> to vector<8x128xf32>
    %44 = arith.mulf %41, %43 : vector<8x128xf32>
    %45 = arith.addf %40, %44 : vector<8x128xf32>
    %c0_38 = arith.constant 0 : index
    %c0_39 = arith.constant 0 : index
    %46 = vector.load %arg6[%c0_38, %c0_39] : memref<1x128xf32, #tpu.memory_space<vmem>>, vector<1x128xf32>
    %47 = vector.broadcast %46 : vector<1x128xf32> to vector<8x128xf32>
    %48 = arith.addf %45, %47 : vector<8x128xf32>
    %49 = arith.negf %48 : vector<8x128xf32>
    %50 = math.exp %49 : vector<8x128xf32>
    %cst_40 = arith.constant 1.000000e+00 : f32
    %51 = vector.broadcast %cst_40 : f32 to vector<8x128xf32>
    %52 = arith.addf %51, %50 : vector<8x128xf32>
    %53 = arith.divf %51, %52 : vector<8x128xf32>
    %54 = arith.mulf %48, %53 : vector<8x128xf32>
    %55 = arith.truncf %54 : vector<8x128xf32> to vector<8x128xbf16>
    %c0_41 = arith.constant 0 : index
    %c0_42 = arith.constant 0 : index
    %56 = vector.load %arg7[%c0_41, %c0_42] : memref<128x160xbf16, #tpu.memory_space<vmem>>, vector<128x160xbf16>
    %cst_43 = arith.constant dense<0.000000e+00> : vector<8x160xf32>
    %57 = tpu.matmul %55, %56, %cst_43 {dimension_numbers = #tpu.dot_dimension_numbers<[1], [0], [0], [1], [0, 0, 1, 1], [], []>} : vector<8x128xbf16>, vector<128x160xbf16>, vector<8x160xf32> -> vector<8x160xf32>
    %58 = vector.extract_strided_slice %57 {offsets = [0, 0], sizes = [8, 128], strides = [1, 1]} : vector<8x160xf32> to vector<8x128xf32>
    %c0_44 = arith.constant 0 : index
    %c0_45 = arith.constant 0 : index
    %59 = vector.load %arg8[%c0_44, %c0_45] : memref<1x128xf32, #tpu.memory_space<vmem>>, vector<1x128xf32>
    %60 = vector.broadcast %59 : vector<1x128xf32> to vector<8x128xf32>
    %61 = arith.addf %58, %60 : vector<8x128xf32>
    %cst_46 = arith.constant 0.000000e+00 : f32
    %62 = vector.broadcast %cst_46 : f32 to vector<8x128xf32>
    %63 = arith.maximumf %61, %62 : vector<8x128xf32>
    %64 = vector.broadcast %cst_46 : f32 to vector<8x128xf32>
    %65 = arith.subf %61, %64 : vector<8x128xf32>
    %66 = arith.cmpf one, %65, %65 : vector<8x128xf32>
    %67 = vector.broadcast %cst_46 : f32 to vector<8x128xf32>
    %68 = arith.addf %61, %67 : vector<8x128xf32>
    %69 = math.absf %65 : vector<8x128xf32>
    %cst_47 = arith.constant 0.000000e+00 : f32
    %70 = vector.broadcast %cst_47 : f32 to vector<8x128xf32>
    %71 = arith.subf %70, %69 : vector<8x128xf32>
    %72 = math.exp %71 : vector<8x128xf32>
    %73 = math.log1p %72 : vector<8x128xf32>
    %74 = arith.addf %63, %73 : vector<8x128xf32>
    %75 = arith.select %66, %68, %74 : vector<8x128xi1>, vector<8x128xf32>
    %76 = tpu.iota {dimensions = array<i32: 2>} : vector<8x8x128xi32>
    %c64_i32 = arith.constant 64 : i32
    %77 = vector.broadcast %c64_i32 : i32 to vector<8x8x128xi32>
    %78 = arith.cmpi slt, %76, %77 : vector<8x8x128xi32>
    %79 = vector.extract_strided_slice %57 {offsets = [0, 128], sizes = [8, 32], strides = [1, 1]} : vector<8x160xf32> to vector<8x32xf32>
    %80 = vector.shape_cast %79 : vector<8x32xf32> to vector<8x32x1xf32>
    %81 = vector.extract_strided_slice %80 {offsets = [0, 0, 0], sizes = [8, 8, 1], strides = [1, 1, 1]} : vector<8x32x1xf32> to vector<8x8x1xf32>
    %82 = vector.shape_cast %81 : vector<8x8x1xf32> to vector<8x8x1xf32>
    %83 = vector.broadcast %82 : vector<8x8x1xf32> to vector<8x8x128xf32>
    %84 = vector.extract_strided_slice %80 {offsets = [0, 8, 0], sizes = [8, 8, 1], strides = [1, 1, 1]} : vector<8x32x1xf32> to vector<8x8x1xf32>
    %85 = vector.shape_cast %84 : vector<8x8x1xf32> to vector<8x8x1xf32>
    %86 = vector.broadcast %85 : vector<8x8x1xf32> to vector<8x8x128xf32>
    %87 = arith.select %78, %83, %86 : vector<8x8x128xi1>, vector<8x8x128xf32>
    %88 = vector.extract_strided_slice %80 {offsets = [0, 16, 0], sizes = [8, 8, 1], strides = [1, 1, 1]} : vector<8x32x1xf32> to vector<8x8x1xf32>
    %89 = vector.shape_cast %88 : vector<8x8x1xf32> to vector<8x8x1xf32>
    %90 = vector.broadcast %89 : vector<8x8x1xf32> to vector<8x8x128xf32>
    %91 = vector.extract_strided_slice %80 {offsets = [0, 24, 0], sizes = [8, 8, 1], strides = [1, 1, 1]} : vector<8x32x1xf32> to vector<8x8x1xf32>
    %92 = vector.shape_cast %91 : vector<8x8x1xf32> to vector<8x8x1xf32>
    %93 = vector.broadcast %92 : vector<8x8x1xf32> to vector<8x8x128xf32>
    %94 = arith.select %78, %90, %93 : vector<8x8x128xi1>, vector<8x8x128xf32>
    %95 = vector.shape_cast %75 : vector<8x128xf32> to vector<8x1x128xf32>
    %c0_48 = arith.constant 0 : index
    %c0_49 = arith.constant 0 : index
    %96 = vector.load %arg9[%c0_48, %c0_49] : memref<8x128xf32, #tpu.memory_space<vmem>>, vector<8x128xf32>
    %97 = vector.shape_cast %96 : vector<8x128xf32> to vector<1x8x128xf32>
    %98 = vector.broadcast %95 : vector<8x1x128xf32> to vector<8x8x128xf32>
    %99 = vector.broadcast %97 : vector<1x8x128xf32> to vector<8x8x128xf32>
    %100 = arith.mulf %98, %99 : vector<8x8x128xf32>
    %101 = math.exp %100 : vector<8x8x128xf32>
    %c0_50 = arith.constant 0 : index
    %c0_51 = arith.constant 0 : index
    %c0_52 = arith.constant 0 : index
    %102 = vector.load %arg17[%c0_50, %c0_51, %c0_52] : memref<8x8x128xf32, #tpu.memory_space<vmem>>, vector<8x8x128xf32>
    tpu.vector_store %arg17[%c0_50, %c0_51, %c0_52], %101 {strides = array<i32>} : memref<8x8x128xf32, #tpu.memory_space<vmem>>, vector<8x8x128xf32>,
    %103 = arith.mulf %75, %54 : vector<8x128xf32>
    %104 = vector.shape_cast %103 : vector<8x128xf32> to vector<8x1x128xf32>
    %105 = vector.broadcast %104 : vector<8x1x128xf32> to vector<8x8x128xf32>
    %106 = arith.mulf %87, %105 : vector<8x8x128xf32>
    %c0_53 = arith.constant 0 : index
    %c0_54 = arith.constant 0 : index
    %c0_55 = arith.constant 0 : index
    %107 = vector.load %arg18[%c0_53, %c0_54, %c0_55] : memref<8x8x128xf32, #tpu.memory_space<vmem>>, vector<8x8x128xf32>
    tpu.vector_store %arg18[%c0_53, %c0_54, %c0_55], %106 {strides = array<i32>} : memref<8x8x128xf32, #tpu.memory_space<vmem>>, vector<8x8x128xf32>,
    %c0_56 = arith.constant 0 : index
    %c0_57 = arith.constant 0 : index
    %c0_58 = arith.constant 0 : index
    %108 = vector.load %arg19[%c0_56, %c0_57, %c0_58] : memref<8x8x128xf32, #tpu.memory_space<vmem>>, vector<8x8x128xf32>
    tpu.vector_store %arg19[%c0_56, %c0_57, %c0_58], %94 {strides = array<i32>} : memref<8x8x128xf32, #tpu.memory_space<vmem>>, vector<8x8x128xf32>,
    %109 = tpu.iota {dimensions = array<i32: 0>} : vector<8x1xi32>
    %cst_59 = arith.constant 0.000000e+00 : f32
    %110 = vector.broadcast %cst_59 : f32 to vector<8x128xf32>
    %cst_60 = arith.constant 0.000000e+00 : f32
    %111 = vector.broadcast %cst_60 : f32 to vector<8x128xf32>
    %c0_i32 = arith.constant 0 : i32
    %112 = arith.index_cast %c0_i32 : i32 to index
    %c0_61 = arith.constant 0 : index
    %c0_62 = arith.constant 0 : index
    %113 = vector.load %arg17[%112, %c0_61, %c0_62] : memref<8x8x128xf32, #tpu.memory_space<vmem>>, vector<1x8x128xf32>
    %114 = vector.shape_cast %113 : vector<1x8x128xf32> to vector<8x128xf32>
    %115 = arith.mulf %114, %110 : vector<8x128xf32>
    %116 = arith.index_cast %c0_i32 : i32 to index
    %c0_63 = arith.constant 0 : index
    %c0_64 = arith.constant 0 : index
    %117 = vector.load %arg18[%116, %c0_63, %c0_64] : memref<8x8x128xf32, #tpu.memory_space<vmem>>, vector<1x8x128xf32>
    %118 = vector.shape_cast %117 : vector<1x8x128xf32> to vector<8x128xf32>
    %119 = arith.addf %115, %118 : vector<8x128xf32>
    %120 = arith.index_cast %c0_i32 : i32 to index
    %c0_65 = arith.constant 0 : index
    %c0_66 = arith.constant 0 : index
    %121 = vector.load %arg19[%120, %c0_65, %c0_66] : memref<8x8x128xf32, #tpu.memory_space<vmem>>, vector<1x8x128xf32>
    %122 = vector.shape_cast %121 : vector<1x8x128xf32> to vector<8x128xf32>
    %123 = arith.mulf %119, %122 : vector<8x128xf32>
    %cst_67 = arith.constant dense<0.000000e+00> : vector<128xf32>
    %124 = vector.multi_reduction <add>, %123, %cst_67 [0] : vector<8x128xf32> to vector<128xf32>
    %125 = vector.shape_cast %124 : vector<128xf32> to vector<1x128xf32>
    %126 = vector.broadcast %c0_i32 : i32 to vector<8x1xi32>
    %127 = arith.cmpi eq, %109, %126 : vector<8x1xi32>
    %cst_68 = arith.constant 0.000000e+00 : f32
    %128 = vector.shape_cast %127 : vector<8x1xi1> to vector<8x1xi1>
    %129 = vector.broadcast %128 : vector<8x1xi1> to vector<8x128xi1>
    %130 = vector.shape_cast %125 : vector<1x128xf32> to vector<1x128xf32>
    %131 = vector.broadcast %130 : vector<1x128xf32> to vector<8x128xf32>
    %132 = vector.broadcast %cst_68 : f32 to vector<8x128xf32>
    %133 = arith.select %129, %131, %132 : vector<8x128xi1>, vector<8x128xf32>
    %134 = arith.addf %111, %133 : vector<8x128xf32>
    %c1_i32 = arith.constant 1 : i32
    %135 = arith.index_cast %c1_i32 : i32 to index
    %c0_69 = arith.constant 0 : index
    %c0_70 = arith.constant 0 : index
    %136 = vector.load %arg17[%135, %c0_69, %c0_70] : memref<8x8x128xf32, #tpu.memory_space<vmem>>, vector<1x8x128xf32>
    %137 = vector.shape_cast %136 : vector<1x8x128xf32> to vector<8x128xf32>
    %138 = arith.mulf %137, %119 : vector<8x128xf32>
    %139 = arith.index_cast %c1_i32 : i32 to index
    %c0_71 = arith.constant 0 : index
    %c0_72 = arith.constant 0 : index
    %140 = vector.load %arg18[%139, %c0_71, %c0_72] : memref<8x8x128xf32, #tpu.memory_space<vmem>>, vector<1x8x128xf32>
    %141 = vector.shape_cast %140 : vector<1x8x128xf32> to vector<8x128xf32>
    %142 = arith.addf %138, %141 : vector<8x128xf32>
    %143 = arith.index_cast %c1_i32 : i32 to index
    %c0_73 = arith.constant 0 : index
    %c0_74 = arith.constant 0 : index
    %144 = vector.load %arg19[%143, %c0_73, %c0_74] : memref<8x8x128xf32, #tpu.memory_space<vmem>>, vector<1x8x128xf32>
    %145 = vector.shape_cast %144 : vector<1x8x128xf32> to vector<8x128xf32>
    %146 = arith.mulf %142, %145 : vector<8x128xf32>
    %cst_75 = arith.constant dense<0.000000e+00> : vector<128xf32>
    %147 = vector.multi_reduction <add>, %146, %cst_75 [0] : vector<8x128xf32> to vector<128xf32>
    %148 = vector.shape_cast %147 : vector<128xf32> to vector<1x128xf32>
    %149 = vector.broadcast %c1_i32 : i32 to vector<8x1xi32>
    %150 = arith.cmpi eq, %109, %149 : vector<8x1xi32>
    %cst_76 = arith.constant 0.000000e+00 : f32
    %151 = vector.shape_cast %150 : vector<8x1xi1> to vector<8x1xi1>
    %152 = vector.broadcast %151 : vector<8x1xi1> to vector<8x128xi1>
    %153 = vector.shape_cast %148 : vector<1x128xf32> to vector<1x128xf32>
    %154 = vector.broadcast %153 : vector<1x128xf32> to vector<8x128xf32>
    %155 = vector.broadcast %cst_76 : f32 to vector<8x128xf32>
    %156 = arith.select %152, %154, %155 : vector<8x128xi1>, vector<8x128xf32>
    %157 = arith.addf %134, %156 : vector<8x128xf32>
    %c2_i32 = arith.constant 2 : i32
    %158 = arith.index_cast %c2_i32 : i32 to index
    %c0_77 = arith.constant 0 : index
    %c0_78 = arith.constant 0 : index
    %159 = vector.load %arg17[%158, %c0_77, %c0_78] : memref<8x8x128xf32, #tpu.memory_space<vmem>>, vector<1x8x128xf32>
    %160 = vector.shape_cast %159 : vector<1x8x128xf32> to vector<8x128xf32>
    %161 = arith.mulf %160, %142 : vector<8x128xf32>
    %162 = arith.index_cast %c2_i32 : i32 to index
    %c0_79 = arith.constant 0 : index
    %c0_80 = arith.constant 0 : index
    %163 = vector.load %arg18[%162, %c0_79, %c0_80] : memref<8x8x128xf32, #tpu.memory_space<vmem>>, vector<1x8x128xf32>
    %164 = vector.shape_cast %163 : vector<1x8x128xf32> to vector<8x128xf32>
    %165 = arith.addf %161, %164 : vector<8x128xf32>
    %166 = arith.index_cast %c2_i32 : i32 to index
    %c0_81 = arith.constant 0 : index
    %c0_82 = arith.constant 0 : index
    %167 = vector.load %arg19[%166, %c0_81, %c0_82] : memref<8x8x128xf32, #tpu.memory_space<vmem>>, vector<1x8x128xf32>
    %168 = vector.shape_cast %167 : vector<1x8x128xf32> to vector<8x128xf32>
    %169 = arith.mulf %165, %168 : vector<8x128xf32>
    %cst_83 = arith.constant dense<0.000000e+00> : vector<128xf32>
    %170 = vector.multi_reduction <add>, %169, %cst_83 [0] : vector<8x128xf32> to vector<128xf32>
    %171 = vector.shape_cast %170 : vector<128xf32> to vector<1x128xf32>
    %172 = vector.broadcast %c2_i32 : i32 to vector<8x1xi32>
    %173 = arith.cmpi eq, %109, %172 : vector<8x1xi32>
    %cst_84 = arith.constant 0.000000e+00 : f32
    %174 = vector.shape_cast %173 : vector<8x1xi1> to vector<8x1xi1>
    %175 = vector.broadcast %174 : vector<8x1xi1> to vector<8x128xi1>
    %176 = vector.shape_cast %171 : vector<1x128xf32> to vector<1x128xf32>
    %177 = vector.broadcast %176 : vector<1x128xf32> to vector<8x128xf32>
    %178 = vector.broadcast %cst_84 : f32 to vector<8x128xf32>
    %179 = arith.select %175, %177, %178 : vector<8x128xi1>, vector<8x128xf32>
    %180 = arith.addf %157, %179 : vector<8x128xf32>
    %c3_i32 = arith.constant 3 : i32
    %181 = arith.index_cast %c3_i32 : i32 to index
    %c0_85 = arith.constant 0 : index
    %c0_86 = arith.constant 0 : index
    %182 = vector.load %arg17[%181, %c0_85, %c0_86] : memref<8x8x128xf32, #tpu.memory_space<vmem>>, vector<1x8x128xf32>
    %183 = vector.shape_cast %182 : vector<1x8x128xf32> to vector<8x128xf32>
    %184 = arith.mulf %183, %165 : vector<8x128xf32>
    %185 = arith.index_cast %c3_i32 : i32 to index
    %c0_87 = arith.constant 0 : index
    %c0_88 = arith.constant 0 : index
    %186 = vector.load %arg18[%185, %c0_87, %c0_88] : memref<8x8x128xf32, #tpu.memory_space<vmem>>, vector<1x8x128xf32>
    %187 = vector.shape_cast %186 : vector<1x8x128xf32> to vector<8x128xf32>
    %188 = arith.addf %184, %187 : vector<8x128xf32>
    %189 = arith.index_cast %c3_i32 : i32 to index
    %c0_89 = arith.constant 0 : index
    %c0_90 = arith.constant 0 : index
    %190 = vector.load %arg19[%189, %c0_89, %c0_90] : memref<8x8x128xf32, #tpu.memory_space<vmem>>, vector<1x8x128xf32>
    %191 = vector.shape_cast %190 : vector<1x8x128xf32> to vector<8x128xf32>
    %192 = arith.mulf %188, %191 : vector<8x128xf32>
    %cst_91 = arith.constant dense<0.000000e+00> : vector<128xf32>
    %193 = vector.multi_reduction <add>, %192, %cst_91 [0] : vector<8x128xf32> to vector<128xf32>
    %194 = vector.shape_cast %193 : vector<128xf32> to vector<1x128xf32>
    %195 = vector.broadcast %c3_i32 : i32 to vector<8x1xi32>
    %196 = arith.cmpi eq, %109, %195 : vector<8x1xi32>
    %cst_92 = arith.constant 0.000000e+00 : f32
    %197 = vector.shape_cast %196 : vector<8x1xi1> to vector<8x1xi1>
    %198 = vector.broadcast %197 : vector<8x1xi1> to vector<8x128xi1>
    %199 = vector.shape_cast %194 : vector<1x128xf32> to vector<1x128xf32>
    %200 = vector.broadcast %199 : vector<1x128xf32> to vector<8x128xf32>
    %201 = vector.broadcast %cst_92 : f32 to vector<8x128xf32>
    %202 = arith.select %198, %200, %201 : vector<8x128xi1>, vector<8x128xf32>
    %203 = arith.addf %180, %202 : vector<8x128xf32>
    %c4_i32 = arith.constant 4 : i32
    %204 = arith.index_cast %c4_i32 : i32 to index
    %c0_93 = arith.constant 0 : index
    %c0_94 = arith.constant 0 : index
    %205 = vector.load %arg17[%204, %c0_93, %c0_94] : memref<8x8x128xf32, #tpu.memory_space<vmem>>, vector<1x8x128xf32>
    %206 = vector.shape_cast %205 : vector<1x8x128xf32> to vector<8x128xf32>
    %207 = arith.mulf %206, %188 : vector<8x128xf32>
    %208 = arith.index_cast %c4_i32 : i32 to index
    %c0_95 = arith.constant 0 : index
    %c0_96 = arith.constant 0 : index
    %209 = vector.load %arg18[%208, %c0_95, %c0_96] : memref<8x8x128xf32, #tpu.memory_space<vmem>>, vector<1x8x128xf32>
    %210 = vector.shape_cast %209 : vector<1x8x128xf32> to vector<8x128xf32>
    %211 = arith.addf %207, %210 : vector<8x128xf32>
    %212 = arith.index_cast %c4_i32 : i32 to index
    %c0_97 = arith.constant 0 : index
    %c0_98 = arith.constant 0 : index
    %213 = vector.load %arg19[%212, %c0_97, %c0_98] : memref<8x8x128xf32, #tpu.memory_space<vmem>>, vector<1x8x128xf32>
    %214 = vector.shape_cast %213 : vector<1x8x128xf32> to vector<8x128xf32>
    %215 = arith.mulf %211, %214 : vector<8x128xf32>
    %cst_99 = arith.constant dense<0.000000e+00> : vector<128xf32>
    %216 = vector.multi_reduction <add>, %215, %cst_99 [0] : vector<8x128xf32> to vector<128xf32>
    %217 = vector.shape_cast %216 : vector<128xf32> to vector<1x128xf32>
    %218 = vector.broadcast %c4_i32 : i32 to vector<8x1xi32>
    %219 = arith.cmpi eq, %109, %218 : vector<8x1xi32>
    %cst_100 = arith.constant 0.000000e+00 : f32
    %220 = vector.shape_cast %219 : vector<8x1xi1> to vector<8x1xi1>
    %221 = vector.broadcast %220 : vector<8x1xi1> to vector<8x128xi1>
    %222 = vector.shape_cast %217 : vector<1x128xf32> to vector<1x128xf32>
    %223 = vector.broadcast %222 : vector<1x128xf32> to vector<8x128xf32>
    %224 = vector.broadcast %cst_100 : f32 to vector<8x128xf32>
    %225 = arith.select %221, %223, %224 : vector<8x128xi1>, vector<8x128xf32>
    %226 = arith.addf %203, %225 : vector<8x128xf32>
    %c5_i32 = arith.constant 5 : i32
    %227 = arith.index_cast %c5_i32 : i32 to index
    %c0_101 = arith.constant 0 : index
    %c0_102 = arith.constant 0 : index
    %228 = vector.load %arg17[%227, %c0_101, %c0_102] : memref<8x8x128xf32, #tpu.memory_space<vmem>>, vector<1x8x128xf32>
    %229 = vector.shape_cast %228 : vector<1x8x128xf32> to vector<8x128xf32>
    %230 = arith.mulf %229, %211 : vector<8x128xf32>
    %231 = arith.index_cast %c5_i32 : i32 to index
    %c0_103 = arith.constant 0 : index
    %c0_104 = arith.constant 0 : index
    %232 = vector.load %arg18[%231, %c0_103, %c0_104] : memref<8x8x128xf32, #tpu.memory_space<vmem>>, vector<1x8x128xf32>
    %233 = vector.shape_cast %232 : vector<1x8x128xf32> to vector<8x128xf32>
    %234 = arith.addf %230, %233 : vector<8x128xf32>
    %235 = arith.index_cast %c5_i32 : i32 to index
    %c0_105 = arith.constant 0 : index
    %c0_106 = arith.constant 0 : index
    %236 = vector.load %arg19[%235, %c0_105, %c0_106] : memref<8x8x128xf32, #tpu.memory_space<vmem>>, vector<1x8x128xf32>
    %237 = vector.shape_cast %236 : vector<1x8x128xf32> to vector<8x128xf32>
    %238 = arith.mulf %234, %237 : vector<8x128xf32>
    %cst_107 = arith.constant dense<0.000000e+00> : vector<128xf32>
    %239 = vector.multi_reduction <add>, %238, %cst_107 [0] : vector<8x128xf32> to vector<128xf32>
    %240 = vector.shape_cast %239 : vector<128xf32> to vector<1x128xf32>
    %241 = vector.broadcast %c5_i32 : i32 to vector<8x1xi32>
    %242 = arith.cmpi eq, %109, %241 : vector<8x1xi32>
    %cst_108 = arith.constant 0.000000e+00 : f32
    %243 = vector.shape_cast %242 : vector<8x1xi1> to vector<8x1xi1>
    %244 = vector.broadcast %243 : vector<8x1xi1> to vector<8x128xi1>
    %245 = vector.shape_cast %240 : vector<1x128xf32> to vector<1x128xf32>
    %246 = vector.broadcast %245 : vector<1x128xf32> to vector<8x128xf32>
    %247 = vector.broadcast %cst_108 : f32 to vector<8x128xf32>
    %248 = arith.select %244, %246, %247 : vector<8x128xi1>, vector<8x128xf32>
    %249 = arith.addf %226, %248 : vector<8x128xf32>
    %c6_i32 = arith.constant 6 : i32
    %250 = arith.index_cast %c6_i32 : i32 to index
    %c0_109 = arith.constant 0 : index
    %c0_110 = arith.constant 0 : index
    %251 = vector.load %arg17[%250, %c0_109, %c0_110] : memref<8x8x128xf32, #tpu.memory_space<vmem>>, vector<1x8x128xf32>
    %252 = vector.shape_cast %251 : vector<1x8x128xf32> to vector<8x128xf32>
    %253 = arith.mulf %252, %234 : vector<8x128xf32>
    %254 = arith.index_cast %c6_i32 : i32 to index
    %c0_111 = arith.constant 0 : index
    %c0_112 = arith.constant 0 : index
    %255 = vector.load %arg18[%254, %c0_111, %c0_112] : memref<8x8x128xf32, #tpu.memory_space<vmem>>, vector<1x8x128xf32>
    %256 = vector.shape_cast %255 : vector<1x8x128xf32> to vector<8x128xf32>
    %257 = arith.addf %253, %256 : vector<8x128xf32>
    %258 = arith.index_cast %c6_i32 : i32 to index
    %c0_113 = arith.constant 0 : index
    %c0_114 = arith.constant 0 : index
    %259 = vector.load %arg19[%258, %c0_113, %c0_114] : memref<8x8x128xf32, #tpu.memory_space<vmem>>, vector<1x8x128xf32>
    %260 = vector.shape_cast %259 : vector<1x8x128xf32> to vector<8x128xf32>
    %261 = arith.mulf %257, %260 : vector<8x128xf32>
    %cst_115 = arith.constant dense<0.000000e+00> : vector<128xf32>
    %262 = vector.multi_reduction <add>, %261, %cst_115 [0] : vector<8x128xf32> to vector<128xf32>
    %263 = vector.shape_cast %262 : vector<128xf32> to vector<1x128xf32>
    %264 = vector.broadcast %c6_i32 : i32 to vector<8x1xi32>
    %265 = arith.cmpi eq, %109, %264 : vector<8x1xi32>
    %cst_116 = arith.constant 0.000000e+00 : f32
    %266 = vector.shape_cast %265 : vector<8x1xi1> to vector<8x1xi1>
    %267 = vector.broadcast %266 : vector<8x1xi1> to vector<8x128xi1>
    %268 = vector.shape_cast %263 : vector<1x128xf32> to vector<1x128xf32>
    %269 = vector.broadcast %268 : vector<1x128xf32> to vector<8x128xf32>
    %270 = vector.broadcast %cst_116 : f32 to vector<8x128xf32>
    %271 = arith.select %267, %269, %270 : vector<8x128xi1>, vector<8x128xf32>
    %272 = arith.addf %249, %271 : vector<8x128xf32>
    %c7_i32 = arith.constant 7 : i32
    %273 = arith.index_cast %c7_i32 : i32 to index
    %c0_117 = arith.constant 0 : index
    %c0_118 = arith.constant 0 : index
    %274 = vector.load %arg17[%273, %c0_117, %c0_118] : memref<8x8x128xf32, #tpu.memory_space<vmem>>, vector<1x8x128xf32>
    %275 = vector.shape_cast %274 : vector<1x8x128xf32> to vector<8x128xf32>
    %276 = arith.mulf %275, %257 : vector<8x128xf32>
    %277 = arith.index_cast %c7_i32 : i32 to index
    %c0_119 = arith.constant 0 : index
    %c0_120 = arith.constant 0 : index
    %278 = vector.load %arg18[%277, %c0_119, %c0_120] : memref<8x8x128xf32, #tpu.memory_space<vmem>>, vector<1x8x128xf32>
    %279 = vector.shape_cast %278 : vector<1x8x128xf32> to vector<8x128xf32>
    %280 = arith.addf %276, %279 : vector<8x128xf32>
    %281 = arith.index_cast %c7_i32 : i32 to index
    %c0_121 = arith.constant 0 : index
    %c0_122 = arith.constant 0 : index
    %282 = vector.load %arg19[%281, %c0_121, %c0_122] : memref<8x8x128xf32, #tpu.memory_space<vmem>>, vector<1x8x128xf32>
    %283 = vector.shape_cast %282 : vector<1x8x128xf32> to vector<8x128xf32>
    %284 = arith.mulf %280, %283 : vector<8x128xf32>
    %cst_123 = arith.constant dense<0.000000e+00> : vector<128xf32>
    %285 = vector.multi_reduction <add>, %284, %cst_123 [0] : vector<8x128xf32> to vector<128xf32>
    %286 = vector.shape_cast %285 : vector<128xf32> to vector<1x128xf32>
    %287 = vector.broadcast %c7_i32 : i32 to vector<8x1xi32>
    %288 = arith.cmpi eq, %109, %287 : vector<8x1xi32>
    %cst_124 = arith.constant 0.000000e+00 : f32
    %289 = vector.shape_cast %288 : vector<8x1xi1> to vector<8x1xi1>
    %290 = vector.broadcast %289 : vector<8x1xi1> to vector<8x128xi1>
    %291 = vector.shape_cast %286 : vector<1x128xf32> to vector<1x128xf32>
    %292 = vector.broadcast %291 : vector<1x128xf32> to vector<8x128xf32>
    %293 = vector.broadcast %cst_124 : f32 to vector<8x128xf32>
    %294 = arith.select %290, %292, %293 : vector<8x128xi1>, vector<8x128xf32>
    %295 = arith.addf %272, %294 : vector<8x128xf32>
    %c8_i32 = arith.constant 8 : i32
    %c0_125 = arith.constant 0 : index
    %c0_126 = arith.constant 0 : index
    %296 = vector.load %arg10[%c0_125, %c0_126] : memref<1x128xf32, #tpu.memory_space<vmem>>, vector<1x128xf32>
    %297 = vector.broadcast %296 : vector<1x128xf32> to vector<8x128xf32>
    %298 = arith.mulf %297, %54 : vector<8x128xf32>
    %299 = arith.addf %295, %298 : vector<8x128xf32>
    %300 = arith.negf %24 : vector<8x128xf32>
    %301 = math.exp %300 : vector<8x128xf32>
    %cst_127 = arith.constant 1.000000e+00 : f32
    %302 = vector.broadcast %cst_127 : f32 to vector<8x128xf32>
    %303 = arith.addf %302, %301 : vector<8x128xf32>
    %304 = arith.divf %302, %303 : vector<8x128xf32>
    %305 = arith.mulf %24, %304 : vector<8x128xf32>
    %306 = arith.mulf %299, %305 : vector<8x128xf32>
    %307 = arith.truncf %306 : vector<8x128xf32> to vector<8x128xbf16>
    %c0_128 = arith.constant 0 : index
    %c0_129 = arith.constant 0 : index
    %308 = vector.load %arg11[%c0_128, %c0_129] : memref<128x64xbf16, #tpu.memory_space<vmem>>, vector<128x64xbf16>
    %cst_130 = arith.constant dense<0.000000e+00> : vector<8x64xf32>
    %309 = tpu.matmul %307, %308, %cst_130 {dimension_numbers = #tpu.dot_dimension_numbers<[1], [0], [0], [1], [0, 0, 1, 1], [], []>} : vector<8x128xbf16>, vector<128x64xbf16>, vector<8x64xf32> -> vector<8x64xf32>
    %310 = tpu.iota {dimensions = array<i32: 1>} : vector<1x64xi32>
    %c32_i32 = arith.constant 32 : i32
    %311 = vector.broadcast %c32_i32 : i32 to vector<1x64xi32>
    %312 = arith.cmpi slt, %310, %311 : vector<1x64xi32>
    %cst_131 = arith.constant 0.000000e+00 : f32
    %313 = vector.shape_cast %312 : vector<1x64xi1> to vector<1x64xi1>
    %314 = vector.broadcast %313 : vector<1x64xi1> to vector<8x64xi1>
    %315 = vector.broadcast %cst_131 : f32 to vector<8x64xf32>
    %316 = arith.select %314, %309, %315 : vector<8x64xi1>, vector<8x64xf32>
    %cst_132 = arith.constant dense<0.000000e+00> : vector<8xf32>
    %317 = vector.multi_reduction <add>, %316, %cst_132 [1] : vector<8x64xf32> to vector<8xf32>
    %318 = vector.shape_cast %317 : vector<8xf32> to vector<8x1xf32>
    %cst_133 = arith.constant 0.000000e+00 : f32
    %319 = vector.shape_cast %312 : vector<1x64xi1> to vector<1x64xi1>
    %320 = vector.broadcast %319 : vector<1x64xi1> to vector<8x64xi1>
    %321 = vector.broadcast %cst_133 : f32 to vector<8x64xf32>
    %322 = arith.select %320, %321, %309 : vector<8x64xi1>, vector<8x64xf32>
    %cst_134 = arith.constant dense<0.000000e+00> : vector<8xf32>
    %323 = vector.multi_reduction <add>, %322, %cst_134 [1] : vector<8x64xf32> to vector<8xf32>
    %324 = vector.shape_cast %323 : vector<8xf32> to vector<8x1xf32>
    %325 = vector.shape_cast %312 : vector<1x64xi1> to vector<1x64xi1>
    %326 = vector.broadcast %325 : vector<1x64xi1> to vector<8x64xi1>
    %327 = vector.shape_cast %318 : vector<8x1xf32> to vector<8x1xf32>
    %328 = vector.broadcast %327 : vector<8x1xf32> to vector<8x64xf32>
    %329 = vector.shape_cast %324 : vector<8x1xf32> to vector<8x1xf32>
    %330 = vector.broadcast %329 : vector<8x1xf32> to vector<8x64xf32>
    %331 = arith.select %326, %328, %330 : vector<8x64xi1>, vector<8x64xf32>
    %cst_135 = arith.constant 3.125000e-02 : f32
    %332 = vector.broadcast %cst_135 : f32 to vector<8x64xf32>
    %333 = arith.mulf %331, %332 : vector<8x64xf32>
    %334 = arith.subf %309, %333 : vector<8x64xf32>
    %335 = arith.mulf %334, %334 : vector<8x64xf32>
    %cst_136 = arith.constant 0.000000e+00 : f32
    %336 = vector.shape_cast %312 : vector<1x64xi1> to vector<1x64xi1>
    %337 = vector.broadcast %336 : vector<1x64xi1> to vector<8x64xi1>
    %338 = vector.broadcast %cst_136 : f32 to vector<8x64xf32>
    %339 = arith.select %337, %335, %338 : vector<8x64xi1>, vector<8x64xf32>
    %cst_137 = arith.constant dense<0.000000e+00> : vector<8xf32>
    %340 = vector.multi_reduction <add>, %339, %cst_137 [1] : vector<8x64xf32> to vector<8xf32>
    %341 = vector.shape_cast %340 : vector<8xf32> to vector<8x1xf32>
    %cst_138 = arith.constant 0.000000e+00 : f32
    %342 = vector.shape_cast %312 : vector<1x64xi1> to vector<1x64xi1>
    %343 = vector.broadcast %342 : vector<1x64xi1> to vector<8x64xi1>
    %344 = vector.broadcast %cst_138 : f32 to vector<8x64xf32>
    %345 = arith.select %343, %344, %335 : vector<8x64xi1>, vector<8x64xf32>
    %cst_139 = arith.constant dense<0.000000e+00> : vector<8xf32>
    %346 = vector.multi_reduction <add>, %345, %cst_139 [1] : vector<8x64xf32> to vector<8xf32>
    %347 = vector.shape_cast %346 : vector<8xf32> to vector<8x1xf32>
    %348 = vector.shape_cast %312 : vector<1x64xi1> to vector<1x64xi1>
    %349 = vector.broadcast %348 : vector<1x64xi1> to vector<8x64xi1>
    %350 = vector.shape_cast %341 : vector<8x1xf32> to vector<8x1xf32>
    %351 = vector.broadcast %350 : vector<8x1xf32> to vector<8x64xf32>
    %352 = vector.shape_cast %347 : vector<8x1xf32> to vector<8x1xf32>
    %353 = vector.broadcast %352 : vector<8x1xf32> to vector<8x64xf32>
    %354 = arith.select %349, %351, %353 : vector<8x64xi1>, vector<8x64xf32>
    %cst_140 = arith.constant 3.125000e-02 : f32
    %355 = vector.broadcast %cst_140 : f32 to vector<8x64xf32>
    %356 = arith.mulf %354, %355 : vector<8x64xf32>
    %cst_141 = arith.constant 9.99999997E-7 : f32
    %357 = vector.broadcast %cst_141 : f32 to vector<8x64xf32>
    %358 = arith.addf %356, %357 : vector<8x64xf32>
    %359 = math.rsqrt %358 : vector<8x64xf32>
    %360 = arith.mulf %334, %359 : vector<8x64xf32>
    %c0_142 = arith.constant 0 : index
    %c0_143 = arith.constant 0 : index
    %361 = vector.load %arg12[%c0_142, %c0_143] : memref<1x64xf32, #tpu.memory_space<vmem>>, vector<1x64xf32>
    %362 = vector.broadcast %361 : vector<1x64xf32> to vector<8x64xf32>
    %363 = arith.mulf %360, %362 : vector<8x64xf32>
    %364 = arith.addf %19, %363 : vector<8x64xf32>
    %c0_144 = arith.constant 0 : index
    %c0_145 = arith.constant 0 : index
    %365 = vector.load %arg13[%c0_144, %c0_145] : memref<1x64xf32, #tpu.memory_space<vmem>>, vector<1x64xf32>
    %366 = vector.broadcast %365 : vector<1x64xf32> to vector<8x64xf32>
    %367 = arith.addf %364, %366 : vector<8x64xf32>
    %368 = arith.truncf %367 : vector<8x64xf32> to vector<8x64xbf16>
    %c0_146 = arith.constant 0 : index
    %c0_147 = arith.constant 0 : index
    %c0_148 = arith.constant 0 : index
    %369 = vector.load %arg14[%c0_146, %c0_147, %c0_148] : memref<1x8x64xbf16, #tpu.memory_space<vmem>>, vector<1x8x64xbf16>
    %370 = vector.shape_cast %369 : vector<1x8x64xbf16> to vector<8x64xbf16>
    %371 = vector.shape_cast %368 : vector<8x64xbf16> to vector<1x8x64xbf16>
    tpu.vector_store %arg14[%c0_146, %c0_147, %c0_148], %371 {strides = array<i32>} : memref<1x8x64xbf16, #tpu.memory_space<vmem>>, vector<1x8x64xbf16>,
    return
  }
  func.func @transform_0(%arg0: i32) -> (i32, i32, i32) {
    %c0_i32 = arith.constant 0 : i32
    %c0_i32_0 = arith.constant 0 : i32
    %c0_i32_1 = arith.constant 0 : i32
    return %arg0, %c0_i32, %c0_i32_0 : i32, i32, i32
  }
  func.func @transform_1(%arg0: i32) -> (i32, i32) {
    %c0_i32 = arith.constant 0 : i32
    %c0_i32_0 = arith.constant 0 : i32
    %c0_i32_1 = arith.constant 0 : i32
    return %c0_i32, %c0_i32_0 : i32, i32
  }
  func.func @transform_2(%arg0: i32) -> (i32, i32) {
    %c0_i32 = arith.constant 0 : i32
    %c0_i32_0 = arith.constant 0 : i32
    %c0_i32_1 = arith.constant 0 : i32
    return %c0_i32, %c0_i32_0 : i32, i32
  }
  func.func @transform_3(%arg0: i32) -> (i32, i32) {
    %c0_i32 = arith.constant 0 : i32
    %c0_i32_0 = arith.constant 0 : i32
    %c0_i32_1 = arith.constant 0 : i32
    return %c0_i32, %c0_i32_0 : i32, i32
  }
  func.func @transform_4(%arg0: i32) -> (i32, i32) {
    %c0_i32 = arith.constant 0 : i32
    %c0_i32_0 = arith.constant 0 : i32
    %c0_i32_1 = arith.constant 0 : i32
    return %c0_i32, %c0_i32_0 : i32, i32
  }
  func.func @transform_5(%arg0: i32) -> (i32, i32) {
    %c0_i32 = arith.constant 0 : i32
    %c0_i32_0 = arith.constant 0 : i32
    %c0_i32_1 = arith.constant 0 : i32
    return %c0_i32, %c0_i32_0 : i32, i32
  }
  func.func @transform_6(%arg0: i32) -> (i32, i32) {
    %c0_i32 = arith.constant 0 : i32
    %c0_i32_0 = arith.constant 0 : i32
    %c0_i32_1 = arith.constant 0 : i32
    return %c0_i32, %c0_i32_0 : i32, i32
  }
  func.func @transform_7(%arg0: i32) -> (i32, i32) {
    %c0_i32 = arith.constant 0 : i32
    %c0_i32_0 = arith.constant 0 : i32
    %c0_i32_1 = arith.constant 0 : i32
    return %c0_i32, %c0_i32_0 : i32, i32
  }
  func.func @transform_8(%arg0: i32) -> (i32, i32) {
    %c0_i32 = arith.constant 0 : i32
    %c0_i32_0 = arith.constant 0 : i32
    %c0_i32_1 = arith.constant 0 : i32
    return %c0_i32, %c0_i32_0 : i32, i32
  }
  func.func @transform_9(%arg0: i32) -> (i32, i32) {
    %c0_i32 = arith.constant 0 : i32
    %c0_i32_0 = arith.constant 0 : i32
    %c0_i32_1 = arith.constant 0 : i32
    return %c0_i32, %c0_i32_0 : i32, i32
  }
  func.func @transform_10(%arg0: i32) -> (i32, i32) {
    %c0_i32 = arith.constant 0 : i32
    %c0_i32_0 = arith.constant 0 : i32
    %c0_i32_1 = arith.constant 0 : i32
    return %c0_i32, %c0_i32_0 : i32, i32
  }
  func.func @transform_11(%arg0: i32) -> (i32, i32) {
    %c0_i32 = arith.constant 0 : i32
    %c0_i32_0 = arith.constant 0 : i32
    %c0_i32_1 = arith.constant 0 : i32
    return %c0_i32, %c0_i32_0 : i32, i32
  }
  func.func @transform_12(%arg0: i32) -> (i32, i32) {
    %c0_i32 = arith.constant 0 : i32
    %c0_i32_0 = arith.constant 0 : i32
    %c0_i32_1 = arith.constant 0 : i32
    return %c0_i32, %c0_i32_0 : i32, i32
  }
  func.func @transform_13(%arg0: i32) -> (i32, i32, i32) {
    %c0_i32 = arith.constant 0 : i32
    %c0_i32_0 = arith.constant 0 : i32
    %c0_i32_1 = arith.constant 0 : i32
    return %arg0, %c0_i32, %c0_i32_0 : i32, i32, i32
  }
}

</mosaic_0001>

<llo_original>
// kernel: cossm_forward.1
$region0: #{cossm_forward.1}
  #allocation0 [shape = 'u32[]', space=smem, size = 0x4, offset = 0x4, fixed_abs, tag = 'smem constant byte address 0x4 - core index']
  #allocation1 [shape = 'u32[144,128]{1,0:T(1,128)}', space=vmem, size = 0x12000, scoped, tag = 'internal scratch']
  #allocation2 [shape = 'bf16[10,8]{1,0:T(8,128)(2,1)}', space=vmem, size = 0x1000, scoped, tag = 'scratch operand']
  #allocation3 [shape = 'f32[11,128]{1,0:T(8,128)}', space=vmem, size = 0x2000, scoped, tag = 'scratch operand']
  #allocation4 [shape = 'f32[8,8,128]{2,1,0:T(8,128)}', space=vmem, size = 0x8000, scoped, tag = 'scratch operand']
  #allocation5 [shape = 'f32[8,8,128]{2,1,0:T(8,128)}', space=vmem, size = 0x8000, scoped, tag = 'scratch operand']
  #allocation6 [shape = 'f32[8,8,128]{2,1,0:T(8,128)}', space=vmem, size = 0x8000, scoped, tag = 'scratch operand']
  %s0 = inlined_call_operand.vmem [shape: bf16[2,8,8], index: 0, kind: input, shape index: {}]
  %s1 = inlined_call_operand.vmem [shape: bf16[24,128], index: 1, kind: input, shape index: {}]
  %s2 = inlined_call_operand.vmem [shape: f32[1,64], index: 2, kind: input, shape index: {}]
  %s3 = inlined_call_operand.vmem [shape: bf16[64,256], index: 3, kind: input, shape index: {}]
  %s4 = inlined_call_operand.vmem [shape: f32[4,128], index: 4, kind: input, shape index: {}]
  %s5 = inlined_call_operand.vmem [shape: f32[1,128], index: 5, kind: input, shape index: {}]
  %s6 = inlined_call_operand.vmem [shape: bf16[128,160], index: 6, kind: input, shape index: {}]
  %s7 = inlined_call_operand.vmem [shape: f32[1,128], index: 7, kind: input, shape index: {}]
  %s8 = inlined_call_operand.vmem [shape: f32[8,128], index: 8, kind: input, shape index: {}]
  %s9 = inlined_call_operand.vmem [shape: f32[1,128], index: 9, kind: input, shape index: {}]
  %s10 = inlined_call_operand.vmem [shape: bf16[128,64], index: 10, kind: input, shape index: {}]
  %s11 = inlined_call_operand.vmem [shape: f32[1,64], index: 11, kind: input, shape index: {}]
  %s12 = inlined_call_operand.vmem [shape: f32[1,64], index: 12, kind: input, shape index: {}]
  %s13 = inlined_call_operand.vmem [shape: bf16[2,8,64], index: 13, kind: output, shape index: {}]
  %s14 = sld [smem:[#allocation0]]
  $region85: #{cossm_forward.1} parent=0
    _
  %s16 = ssub.s32 1, %s14
  %s17 = scalar_select 0, %s16, %s14
  loop: start=0, step=1, limit=4
  $region2: #{cossm_forward.1} parent=0 // loop_pre_header
    _
  $region3: #{cossm_forward.1} parent=0 // loop_header
    %s19 = sphi 0, %s23
    %p20 = scmp.ge.s32.totalorder %s19, 4
    %s29 = sphi 0, %s31
    %s32 = sphi 0, %s29
    %s33 = sphi 0, %s32
    %s49 = sphi 0, %s33
    %s53 = sphi 0, %s53
    %s55 = sphi 0, %s53
    %s56 = sphi 0, %s55
    %s70 = sphi 0, %s56
    %s74 = sphi 0, %s74
    %s76 = sphi 0, %s74
    %s77 = sphi 0, %s76
    %s91 = sphi 0, %s77
    %s95 = sphi 0, %s95
    %s97 = sphi 0, %s95
    %s98 = sphi 0, %s97
    %s112 = sphi 0, %s98
    %s116 = sphi 0, %s116
    %s118 = sphi 0, %s116
    %s119 = sphi 0, %s118
    %s133 = sphi 0, %s119
    %s137 = sphi 0, %s137
    %s139 = sphi 0, %s137
    %s140 = sphi 0, %s139
    %s154 = sphi 0, %s140
    %s158 = sphi 0, %s158
    %s160 = sphi 0, %s158
    %s161 = sphi 0, %s160
    %s175 = sphi 0, %s161
    %s179 = sphi 0, %s179
    %s181 = sphi 0, %s179
    %s182 = sphi 0, %s181
    %s196 = sphi 0, %s182
    %s200 = sphi 0, %s200
    %s202 = sphi 0, %s200
    %s203 = sphi 0, %s202
    %s217 = sphi 0, %s203
    %s221 = sphi 0, %s221
    %s223 = sphi 0, %s221
    %s224 = sphi 0, %s223
    %s238 = sphi 0, %s224
    %s242 = sphi 0, %s242
    %s244 = sphi 0, %s242
    %s245 = sphi 0, %s244
    %s259 = sphi 0, %s245
    %s263 = sphi 0, %s263
    %s265 = sphi 0, %s263
    %s266 = sphi 0, %s265
    %s280 = sphi 0, %s266
    %s284 = sphi 0, %s284
    %s286 = sphi 0, %s284
    %s287 = sphi 0, %s286
    %s301 = sphi 0, %s287
    %s307 = sphi 0, %s309
    %s310 = sphi 0, %s307
    %s311 = sphi 0, %s310
    %s327 = sphi 0, %s311
  $region4: #{cossm_forward.1} parent=0 // loop_header_branch
    %22 = sbr.rel (%p20) target = $region8
  $region5: #{cossm_forward.1} parent=0 // loop_body
    %s24 = ssub.s32 %s19, 1
    %s25 = ssub.s32 %s19, 2
    %s26 = sadd.s32 %s19, 1
    %s27 = ssub.s32 %s19, %s26
    %p28 = scmp.eq.s32.totalorder %s27, 0
    %s30 = sadd.s32 %s29, 1
    %s31 = scalar_select %p28, %s29, %s30
    %p34 = pneg %p28
    %p35 = scmp.eq.s32.totalorder %s19, 1
    %p36 = por %p34, %p35
    %p37 = scmp.ne.s32.totalorder %s29, %s32
    %p38 = scmp.eq.s32.totalorder %s19, 0
    %p39 = por %p37, %p38
    %p40 = scmp.ne.s32.totalorder %s29, %s32
    %p41 = scmp.eq.s32.totalorder %s24, 1
    %p42 = por %p40, %p41
    %p43 = scmp.ne.s32.totalorder %s32, %s33
    %p44 = scmp.eq.s32.totalorder %s24, 0
    %p45 = por %p43, %p44
    %p46 = scmp.ne.s32.totalorder %s32, %s33
    %p47 = scmp.eq.s32.totalorder %s25, 1
    %p48 = por %p46, %p47
    %p50 = scmp.ne.s32.totalorder %s33, %s49
    %p51 = scmp.eq.s32.totalorder %s25, 0
    %p52 = por %p50, %p51
    %s54 = sadd.s32 %s53, 1
    %p57 = scmp.eq.s32.totalorder %s19, 1
    %p58 = scmp.ne.s32.totalorder %s53, %s55
    %p59 = scmp.eq.s32.totalorder %s19, 0
    %p60 = por %p58, %p59
    %p61 = scmp.ne.s32.totalorder %s53, %s55
    %p62 = scmp.eq.s32.totalorder %s24, 1
    %p63 = por %p61, %p62
    %p64 = scmp.ne.s32.totalorder %s55, %s56
    %p65 = scmp.eq.s32.totalorder %s24, 0
    %p66 = por %p64, %p65
    %p67 = scmp.ne.s32.totalorder %s55, %s56
    %p68 = scmp.eq.s32.totalorder %s25, 1
    %p69 = por %p67, %p68
    %p71 = scmp.ne.s32.totalorder %s56, %s70
    %p72 = scmp.eq.s32.totalorder %s25, 0
    %p73 = por %p71, %p72
    %s75 = sadd.s32 %s74, 1
    %p78 = scmp.eq.s32.totalorder %s19, 1
    %p79 = scmp.ne.s32.totalorder %s74, %s76
    %p80 = scmp.eq.s32.totalorder %s19, 0
    %p81 = por %p79, %p80
    %p82 = scmp.ne.s32.totalorder %s74, %s76
    %p83 = scmp.eq.s32.totalorder %s24, 1
    %p84 = por %p82, %p83
    %p85 = scmp.ne.s32.totalorder %s76, %s77
    %p86 = scmp.eq.s32.totalorder %s24, 0
    %p87 = por %p85, %p86
    %p88 = scmp.ne.s32.totalorder %s76, %s77
    %p89 = scmp.eq.s32.totalorder %s25, 1
    %p90 = por %p88, %p89
    %p92 = scmp.ne.s32.totalorder %s77, %s91
    %p93 = scmp.eq.s32.totalorder %s25, 0
    %p94 = por %p92, %p93
    %s96 = sadd.s32 %s95, 1
    %p99 = scmp.eq.s32.totalorder %s19, 1
    %p100 = scmp.ne.s32.totalorder %s95, %s97
    %p101 = scmp.eq.s32.totalorder %s19, 0
    %p102 = por %p100, %p101
    %p103 = scmp.ne.s32.totalorder %s95, %s97
    %p104 = scmp.eq.s32.totalorder %s24, 1
    %p105 = por %p103, %p104
    %p106 = scmp.ne.s32.totalorder %s97, %s98
    %p107 = scmp.eq.s32.totalorder %s24, 0
    %p108 = por %p106, %p107
    %p109 = scmp.ne.s32.totalorder %s97, %s98
    %p110 = scmp.eq.s32.totalorder %s25, 1
    %p111 = por %p109, %p110
    %p113 = scmp.ne.s32.totalorder %s98, %s112
    %p114 = scmp.eq.s32.totalorder %s25, 0
    %p115 = por %p113, %p114
    %s117 = sadd.s32 %s116, 1
    %p120 = scmp.eq.s32.totalorder %s19, 1
    %p121 = scmp.ne.s32.totalorder %s116, %s118
    %p122 = scmp.eq.s32.totalorder %s19, 0
    %p123 = por %p121, %p122
    %p124 = scmp.ne.s32.totalorder %s116, %s118
    %p125 = scmp.eq.s32.totalorder %s24, 1
    %p126 = por %p124, %p125
    %p127 = scmp.ne.s32.totalorder %s118, %s119
    %p128 = scmp.eq.s32.totalorder %s24, 0
    %p129 = por %p127, %p128
    %p130 = scmp.ne.s32.totalorder %s118, %s119
    %p131 = scmp.eq.s32.totalorder %s25, 1
    %p132 = por %p130, %p131
    %p134 = scmp.ne.s32.totalorder %s119, %s133
    %p135 = scmp.eq.s32.totalorder %s25, 0
    %p136 = por %p134, %p135
    %s138 = sadd.s32 %s137, 1
    %p141 = scmp.eq.s32.totalorder %s19, 1
    %p142 = scmp.ne.s32.totalorder %s137, %s139
    %p143 = scmp.eq.s32.totalorder %s19, 0
    %p144 = por %p142, %p143
    %p145 = scmp.ne.s32.totalorder %s137, %s139
    %p146 = scmp.eq.s32.totalorder %s24, 1
    %p147 = por %p145, %p146
    %p148 = scmp.ne.s32.totalorder %s139, %s140
    %p149 = scmp.eq.s32.totalorder %s24, 0
    %p150 = por %p148, %p149
    %p151 = scmp.ne.s32.totalorder %s139, %s140
    %p152 = scmp.eq.s32.totalorder %s25, 1
    %p153 = por %p151, %p152
    %p155 = scmp.ne.s32.totalorder %s140, %s154
    %p156 = scmp.eq.s32.totalorder %s25, 0
    %p157 = por %p155, %p156
    %s159 = sadd.s32 %s158, 1
    %p162 = scmp.eq.s32.totalorder %s19, 1
    %p163 = scmp.ne.s32.totalorder %s158, %s160
    %p164 = scmp.eq.s32.totalorder %s19, 0
    %p165 = por %p163, %p164
    %p166 = scmp.ne.s32.totalorder %s158, %s160
    %p167 = scmp.eq.s32.totalorder %s24, 1
    %p168 = por %p166, %p167
    %p169 = scmp.ne.s32.totalorder %s160, %s161
    %p170 = scmp.eq.s32.totalorder %s24, 0
    %p171 = por %p169, %p170
    %p172 = scmp.ne.s32.totalorder %s160, %s161
    %p173 = scmp.eq.s32.totalorder %s25, 1
    %p174 = por %p172, %p173
    %p176 = scmp.ne.s32.totalorder %s161, %s175
    %p177 = scmp.eq.s32.totalorder %s25, 0
    %p178 = por %p176, %p177
    %s180 = sadd.s32 %s179, 1
    %p183 = scmp.eq.s32.totalorder %s19, 1
    %p184 = scmp.ne.s32.totalorder %s179, %s181
    %p185 = scmp.eq.s32.totalorder %s19, 0
    %p186 = por %p184, %p185
    %p187 = scmp.ne.s32.totalorder %s179, %s181
    %p188 = scmp.eq.s32.totalorder %s24, 1
    %p189 = por %p187, %p188
    %p190 = scmp.ne.s32.totalorder %s181, %s182
    %p191 = scmp.eq.s32.totalorder %s24, 0
    %p192 = por %p190, %p191
    %p193 = scmp.ne.s32.totalorder %s181, %s182
    %p194 = scmp.eq.s32.totalorder %s25, 1
    %p195 = por %p193, %p194
    %p197 = scmp.ne.s32.totalorder %s182, %s196
    %p198 = scmp.eq.s32.totalorder %s25, 0
    %p199 = por %p197, %p198
    %s201 = sadd.s32 %s200, 1
    %p204 = scmp.eq.s32.totalorder %s19, 1
    %p205 = scmp.ne.s32.totalorder %s200, %s202
    %p206 = scmp.eq.s32.totalorder %s19, 0
    %p207 = por %p205, %p206
    %p208 = scmp.ne.s32.totalorder %s200, %s202
    %p209 = scmp.eq.s32.totalorder %s24, 1
    %p210 = por %p208, %p209
    %p211 = scmp.ne.s32.totalorder %s202, %s203
    %p212 = scmp.eq.s32.totalorder %s24, 0
    %p213 = por %p211, %p212
    %p214 = scmp.ne.s32.totalorder %s202, %s203
    %p215 = scmp.eq.s32.totalorder %s25, 1
    %p216 = por %p214, %p215
    %p218 = scmp.ne.s32.totalorder %s203, %s217
    %p219 = scmp.eq.s32.totalorder %s25, 0
    %p220 = por %p218, %p219
    %s222 = sadd.s32 %s221, 1
    %p225 = scmp.eq.s32.totalorder %s19, 1
    %p226 = scmp.ne.s32.totalorder %s221, %s223
    %p227 = scmp.eq.s32.totalorder %s19, 0
    %p228 = por %p226, %p227
    %p229 = scmp.ne.s32.totalorder %s221, %s223
    %p230 = scmp.eq.s32.totalorder %s24, 1
    %p231 = por %p229, %p230
    %p232 = scmp.ne.s32.totalorder %s223, %s224
    %p233 = scmp.eq.s32.totalorder %s24, 0
    %p234 = por %p232, %p233
    %p235 = scmp.ne.s32.totalorder %s223, %s224
    %p236 = scmp.eq.s32.totalorder %s25, 1
    %p237 = por %p235, %p236
    %p239 = scmp.ne.s32.totalorder %s224, %s238
    %p240 = scmp.eq.s32.totalorder %s25, 0
    %p241 = por %p239, %p240
    %s243 = sadd.s32 %s242, 1
    %p246 = scmp.eq.s32.totalorder %s19, 1
    %p247 = scmp.ne.s32.totalorder %s242, %s244
    %p248 = scmp.eq.s32.totalorder %s19, 0
    %p249 = por %p247, %p248
    %p250 = scmp.ne.s32.totalorder %s242, %s244
    %p251 = scmp.eq.s32.totalorder %s24, 1
    %p252 = por %p250, %p251
    %p253 = scmp.ne.s32.totalorder %s244, %s245
    %p254 = scmp.eq.s32.totalorder %s24, 0
    %p255 = por %p253, %p254
    %p256 = scmp.ne.s32.totalorder %s244, %s245
    %p257 = scmp.eq.s32.totalorder %s25, 1
    %p258 = por %p256, %p257
    %p260 = scmp.ne.s32.totalorder %s245, %s259
    %p261 = scmp.eq.s32.totalorder %s25, 0
    %p262 = por %p260, %p261
    %s264 = sadd.s32 %s263, 1
    %p267 = scmp.eq.s32.totalorder %s19, 1
    %p268 = scmp.ne.s32.totalorder %s263, %s265
    %p269 = scmp.eq.s32.totalorder %s19, 0
    %p270 = por %p268, %p269
    %p271 = scmp.ne.s32.totalorder %s263, %s265
    %p272 = scmp.eq.s32.totalorder %s24, 1
    %p273 = por %p271, %p272
    %p274 = scmp.ne.s32.totalorder %s265, %s266
    %p275 = scmp.eq.s32.totalorder %s24, 0
    %p276 = por %p274, %p275
    %p277 = scmp.ne.s32.totalorder %s265, %s266
    %p278 = scmp.eq.s32.totalorder %s25, 1
    %p279 = por %p277, %p278
    %p281 = scmp.ne.s32.totalorder %s266, %s280
    %p282 = scmp.eq.s32.totalorder %s25, 0
    %p283 = por %p281, %p282
    %s285 = sadd.s32 %s284, 1
    %p288 = scmp.eq.s32.totalorder %s19, 1
    %p289 = scmp.ne.s32.totalorder %s284, %s286
    %p290 = scmp.eq.s32.totalorder %s19, 0
    %p291 = por %p289, %p290
    %p292 = scmp.ne.s32.totalorder %s284, %s286
    %p293 = scmp.eq.s32.totalorder %s24, 1
    %p294 = por %p292, %p293
    %p295 = scmp.ne.s32.totalorder %s286, %s287
    %p296 = scmp.eq.s32.totalorder %s24, 0
    %p297 = por %p295, %p296
    %p298 = scmp.ne.s32.totalorder %s286, %s287
    %p299 = scmp.eq.s32.totalorder %s25, 1
    %p300 = por %p298, %p299
    %p302 = scmp.ne.s32.totalorder %s287, %s301
    %p303 = scmp.eq.s32.totalorder %s25, 0
    %p304 = por %p302, %p303
    %s305 = ssub.s32 %s19, %s26
    %p306 = scmp.eq.s32.totalorder %s305, 0
    %s308 = sadd.s32 %s307, 1
    %s309 = scalar_select %p306, %s307, %s308
    %p312 = pneg %p306
    %p313 = scmp.eq.s32.totalorder %s19, 1
    %p314 = por %p312, %p313
    %p315 = scmp.ne.s32.totalorder %s307, %s310
    %p316 = scmp.eq.s32.totalorder %s19, 0
    %p317 = por %p315, %p316
    %p318 = scmp.ne.s32.totalorder %s307, %s310
    %p319 = scmp.eq.s32.totalorder %s24, 1
    %p320 = por %p318, %p319
    %p321 = scmp.ne.s32.totalorder %s310, %s311
    %p322 = scmp.eq.s32.totalorder %s24, 0
    %p323 = por %p321, %p322
    %p324 = scmp.ne.s32.totalorder %s310, %s311
    %p325 = scmp.eq.s32.totalorder %s25, 1
    %p326 = por %p324, %p325
    %p328 = scmp.ne.s32.totalorder %s311, %s327
    %p329 = scmp.eq.s32.totalorder %s25, 0
    %p330 = por %p328, %p329
    %p331 = scmp.le.s32.totalorder 1, %s19
    %p332 = scmp.lt.s32.totalorder %s19, 3
    %p333 = pnand %p331, %p332
    %p334 = pneg %p333
    // Predicated region
    $region9: #{cossm_forward.1} parent=5 // pred_check
      _
    $region10: #{cossm_forward.1} parent=5 // pred_check_branch
      %336 = sbr.rel (%p333) target = $region12
    $region11: #{cossm_forward.1} parent=5 // pred_region
      %s337 = ssub.s32 %s19, 1
      // Predicated region
      $region13: #{cossm_forward.1} parent=11 // pred_check
        %p338 = pneg %p66
      $region14: #{cossm_forward.1} parent=11 // pred_check_branch
        %340 = sbr.rel (%p338) target = $region16
      $region15: #{cossm_forward.1} parent=11 // pred_region
        _
      $region16: #{cossm_forward.1} parent=11 // pred_fallthru
        _
      // Predicated region
      $region17: #{cossm_forward.1} parent=11 // pred_check
        %p341 = pneg %p87
      $region18: #{cossm_forward.1} parent=11 // pred_check_branch
        %343 = sbr.rel (%p341) target = $region20
      $region19: #{cossm_forward.1} parent=11 // pred_region
        _
      $region20: #{cossm_forward.1} parent=11 // pred_fallthru
        _
      // Predicated region
      $region21: #{cossm_forward.1} parent=11 // pred_check
        %p344 = pneg %p108
      $region22: #{cossm_forward.1} parent=11 // pred_check_branch
        %346 = sbr.rel (%p344) target = $region24
      $region23: #{cossm_forward.1} parent=11 // pred_region
        _
      $region24: #{cossm_forward.1} parent=11 // pred_fallthru
        _
      // Predicated region
      $region25: #{cossm_forward.1} parent=11 // pred_check
        %p347 = pneg %p129
      $region26: #{cossm_forward.1} parent=11 // pred_check_branch
        %349 = sbr.rel (%p347) target = $region28
      $region27: #{cossm_forward.1} parent=11 // pred_region
        _
      $region28: #{cossm_forward.1} parent=11 // pred_fallthru
        _
      // Predicated region
      $region29: #{cossm_forward.1} parent=11 // pred_check
        %p350 = pneg %p150
      $region30: #{cossm_forward.1} parent=11 // pred_check_branch
        %352 = sbr.rel (%p350) target = $region32
      $region31: #{cossm_forward.1} parent=11 // pred_region
        _
      $region32: #{cossm_forward.1} parent=11 // pred_fallthru
        _
      // Predicated region
      $region33: #{cossm_forward.1} parent=11 // pred_check
        %p353 = pneg %p171
      $region34: #{cossm_forward.1} parent=11 // pred_check_branch
        %355 = sbr.rel (%p353) target = $region36
      $region35: #{cossm_forward.1} parent=11 // pred_region
        _
      $region36: #{cossm_forward.1} parent=11 // pred_fallthru
        _
      // Predicated region
      $region37: #{cossm_forward.1} parent=11 // pred_check
        %p356 = pneg %p192
      $region38: #{cossm_forward.1} parent=11 // pred_check_branch
        %358 = sbr.rel (%p356) target = $region40
      $region39: #{cossm_forward.1} parent=11 // pred_region
        _
      $region40: #{cossm_forward.1} parent=11 // pred_fallthru
        _
      // Predicated region
      $region41: #{cossm_forward.1} parent=11 // pred_check
        %p359 = pneg %p213
      $region42: #{cossm_forward.1} parent=11 // pred_check_branch
        %361 = sbr.rel (%p359) target = $region44
      $region43: #{cossm_forward.1} parent=11 // pred_region
        _
      $region44: #{cossm_forward.1} parent=11 // pred_fallthru
        _
      // Predicated region
      $region45: #{cossm_forward.1} parent=11 // pred_check
        %p362 = pneg %p234
      $region46: #{cossm_forward.1} parent=11 // pred_check_branch
        %364 = sbr.rel (%p362) target = $region48
      $region47: #{cossm_forward.1} parent=11 // pred_region
        _
      $region48: #{cossm_forward.1} parent=11 // pred_fallthru
        _
      // Predicated region
      $region49: #{cossm_forward.1} parent=11 // pred_check
        %p365 = pneg %p255
      $region50: #{cossm_forward.1} parent=11 // pred_check_branch
        %367 = sbr.rel (%p365) target = $region52
      $region51: #{cossm_forward.1} parent=11 // pred_region
        _
      $region52: #{cossm_forward.1} parent=11 // pred_fallthru
        _
      // Predicated region
      $region53: #{cossm_forward.1} parent=11 // pred_check
        %p368 = pneg %p276
      $region54: #{cossm_forward.1} parent=11 // pred_check_branch
        %370 = sbr.rel (%p368) target = $region56
      $region55: #{cossm_forward.1} parent=11 // pred_region
        _
      $region56: #{cossm_forward.1} parent=11 // pred_fallthru
        _
      // Predicated region
      $region57: #{cossm_forward.1} parent=11 // pred_check
        %p371 = pneg %p297
      $region58: #{cossm_forward.1} parent=11 // pred_check_branch
        %373 = sbr.rel (%p371) target = $region60
      $region59: #{cossm_forward.1} parent=11 // pred_region
        _
      $region60: #{cossm_forward.1} parent=11 // pred_fallthru
        _
    $region12: #{cossm_forward.1} parent=5 // pred_fallthru
      _
    %p374 = scmp.lt.s32.totalorder %s19, 2
    // Predicated region
    $region61: #{cossm_forward.1} parent=5 // pred_check
      %p375 = pneg %p374
    $region62: #{cossm_forward.1} parent=5 // pred_check_branch
      %377 = sbr.rel (%p375) target = $region64
    $region63: #{cossm_forward.1} parent=5 // pred_region
      // Predicated region
      $region65: #{cossm_forward.1} parent=63 // pred_check
        %p378 = pneg %p39
      $region66: #{cossm_forward.1} parent=63 // pred_check_branch
        %380 = sbr.rel (%p378) target = $region68
      $region67: #{cossm_forward.1} parent=63 // pred_region
        %p381 = scmp.lt.s32.totalorder %s19, 1
        %s382 = scalar_select %p381, %s19, 1
        %s383 = smul.addr %s382, 4
        %s384 = scalar_lea.vmem %s0, %s383
      $region68: #{cossm_forward.1} parent=63 // pred_fallthru
        _
    $region64: #{cossm_forward.1} parent=5 // pred_fallthru
      _
    %p385 = scmp.le.s32.totalorder 1, %s19
    %p386 = scmp.lt.s32.totalorder %s19, 3
    %p387 = pnand %p385, %p386
    %p388 = pneg %p387
    // Predicated region
    $region69: #{cossm_forward.1} parent=5 // pred_check
      _
    $region70: #{cossm_forward.1} parent=5 // pred_check_branch
      %390 = sbr.rel (%p387) target = $region72
    $region71: #{cossm_forward.1} parent=5 // pred_region
      %s391 = ssub.s32 %s19, 1
      %p392 = scmp.lt.s32.totalorder %s24, 1
      %s393 = scalar_select %p392, %s24, 1
      %s394 = smul.addr %s393, 4
      %s395 = scalar_lea.vmem %s0, %s394
      %p396 = pneg %p45
      %p397 = pneg %p42
      %p398 = pneg %p66
      %p399 = pneg %p63
      %p400 = pneg %p87
      %p401 = pneg %p84
      %p402 = pneg %p108
      %p403 = pneg %p105
      %p404 = pneg %p129
      %p405 = pneg %p126
      %p406 = pneg %p150
      %p407 = pneg %p147
      %p408 = pneg %p171
      %p409 = pneg %p168
      %p410 = pneg %p192
      %p411 = pneg %p189
      %p412 = pneg %p213
      %p413 = pneg %p210
      %p414 = pneg %p234
      %p415 = pneg %p231
      %p416 = pneg %p255
      %p417 = pneg %p252
      %p418 = pneg %p276
      %p419 = pneg %p273
      %p420 = pneg %p297
      %p421 = pneg %p294
      %p422 = pneg %p323
      %p423 = pneg %p320
      %p424 = scmp.lt.s32.totalorder %s24, 1
      %s425 = scalar_select %p424, %s24, 1
      %s426 = smul.addr %s425, 4
      %s427 = scalar_lea.vmem %s13, %s426
      %p428 = scmp.lt.s32.totalorder %s24, 1
      %s429 = scalar_select %p428, %s24, 1
      %s430 = smul.addr %s429, 4
      %s431 = scalar_lea.vmem %s0, %s430
      %p432 = scmp.lt.s32.totalorder %s24, 1
      %s433 = scalar_select %p432, %s24, 1
      %s434 = smul.addr %s433, 4
      %s435 = scalar_lea.vmem %s13, %s434
      %vm437 = vcmask 60416
      %438 = vst.msk [vmem:[#allocation2] sm:$0xf] %vm437, 0
      %vm439 = vcmask 57344
      %440 = vst.msk [vmem:[#allocation2 + $0x4] sm:$0x1] %vm439, 0
      %v441 = vld [vmem:[%s431] sm:$0xf]
      %v443 = vshrl.u32 %v441, 16
      %v445 = vrot.slane %v443, 7
      %v446 = vshll.u32 %v441, 16
      %v448 = vor.u32 %v445, %v446
      %v449 = vrot.slane %v445, 4
      %vm452 = vcmask 60416
      %vm453 = vsmask.f32 7938
      %vm454 = vmand %vm452, %vm453
      %v455 = vld [vmem:[#allocation2] sm:$0xf]
      %v456 = vsel %vm454, %v448, %v455
      %457 = vst [vmem:[#allocation2] sm:$0xf] %v456
      %vm458 = vcmask 57344
      %vm459 = vsmask.f32 256
      %vm460 = vmand %vm458, %vm459
      %v461 = vld [vmem:[#allocation2 + $0x4] sm:$0x1]
      %v462 = vsel %vm460, %v449, %v461
      %463 = vst [vmem:[#allocation2 + $0x4] sm:$0x1] %v462
      %v464 = vld [vmem:[#allocation2] sm:$0xf]
      %v465 = vld [vmem:[%s431] sm:$0xf]
      %v466 = vld [vmem:[#allocation2] sm:$0xe]
      %v467 = vld [vmem:[#allocation2 + $0x4] sm:$0x1]
      %v469 = vunpack.c.l.b16 %v465
      %v470 = vpack.c.b16 %v469, %v469
      %471 = vrot.lane.b32.xlu0 %v470, 8
      %v472 = vpop.permute.xlu0 %471
      %v475 = vunpack.c.l.b16 %v466
      %v476 = vunpack.c.l.b16 %v467
      %v477 = vpack.c.b16 %v476, %v475
      %v478 = vrot.slane %v477, 1
      %479 = vrot.lane.b32.xlu0 %v478, 16
      %v480 = vpop.permute.xlu0 %479
      %vm481 = vcmask 64512
      %v484 = vsel %vm481, %v464, %v472
      %vm485 = vcmask 130048
      %v487 = vsel %vm485, %v484, %v480
      %v488 = vld [vmem:[%s1] sm:$0xf]
      %v489 = vld [vmem:[%s1 + $0x4] sm:$0xf]
      %v490 = vld [vmem:[%s1 + $0x8] sm:$0xf]
      %v494 = vunpack.c.l.b16 %v488
      %v495 = vunpack.c.l.b16 %v489
      %v496 = vunpack.c.l.b16 %v490
      %v497 = vpack.c.b16 %v495, %v494
      %v498 = vpack.c.b16 %v496, %v496
      %vm500 = vcmask 195584
      %v501 = vsel %vm500, %v487, 0
      %vm503 = vcmask 1043456
      %v505 = vsel %vm503, %v498, 0
      %507 = vmatprep.subr.bf16.mxu0 0
      %508 = vmatpush1.bf16.msra.mxu0 %v497
      %509 = vmatprep.subr.bf16.mxu0 0
      %510 = vmatpush1.bf16.msra.mxu0 %v505
      %511 = vmatprep.subr.bf16.mxu0 0
      %512 = vmatpush1.bf16.msra.mxu0 0
      %513 = vmatprep.subr.bf16.mxu0 0
      %514 = vmatpush1.bf16.msra.mxu0 0
      %515 = vmatprep.subr.bf16.mxu0 0
      %516 = vmatpush1.bf16.msra.mxu0 0
      %517 = vmatprep.subr.bf16.mxu0 0
      %518 = vmatpush1.bf16.msra.mxu0 0
      %519 = vmatprep.subr.bf16.mxu0 0
      %520 = vmatpush1.bf16.msra.mxu0 0
      %521 = vmatprep.subr.bf16.mxu0 0
      %522 = vmatpush1.bf16.msra.mxu0 0
      %523 = vmatprep.subr.bf16.mxu0 0
      %524 = vmatpush1.bf16.msra.mxu0 0
      %525 = vmatprep.subr.bf16.mxu0 0
      %526 = vmatpush1.bf16.msra.mxu0 0
      %527 = vmatprep.subr.bf16.mxu0 0
      %528 = vmatpush1.bf16.msra.mxu0 0
      %529 = vmatprep.subr.bf16.mxu0 0
      %530 = vmatpush1.bf16.msra.mxu0 0
      %531 = vmatprep.subr.bf16.mxu0 0
      %532 = vmatpush1.bf16.msra.mxu0 0
      %533 = vmatprep.subr.bf16.mxu0 0
      %534 = vmatpush1.bf16.msra.mxu0 0
      %535 = vmatprep.subr.bf16.mxu0 0
      %536 = vmatpush1.bf16.msra.mxu0 0
      %537 = vmatprep.subr.bf16.mxu0 0
      %538 = vmatpush1.bf16.msra.mxu0 0
      %539 = vmatprep.mubr.bf16.mxu0 0
      %540 = vmatmul.mubr.bf16.gmra.mrb[0].mxu0 %v501
      %v541 = vpop.f32.mrb[0].mxu0
      %v542 = vadd.f32 0.0, %v541
      %v543 = vpop.f32.mrb[0].mxu0
      %v544 = vpop.f32.mrb[0].mxu0
      %v545 = vpop.f32.mrb[0].mxu0
      %546 = vdwg.mxu0
      %v547 = vld [vmem:[%s2] sm:$0x1]
      %v549 = vlaneseq
      %v550 = vshrl.u32 %v549, 7
      %v551 = vsub.s32 0, %v550
      %v552 = vrot.slane %v547, %v551
      %v554 = vadd.f32 %v542, %v552
      %v555 = vmax.f32 %v554, 0.0
      %557 = vrot.lane.b32.xlu0 %v542, 64
      %v558 = vpop.permute.xlu0 %557
      %v560 = vadd.f32 %v555, %v558
      %v561 = vpack.c.bf16 %v560, %v560
      %v562 = vld [vmem:[%s3] sm:$0xff]
      %v563 = vld [vmem:[%s3 + $0x8] sm:$0xff]
      %v564 = vld [vmem:[%s3 + $0x10] sm:$0xff]
      %v565 = vld [vmem:[%s3 + $0x18] sm:$0xff]
      %v566 = vld [vmem:[%s3 + $0x20] sm:$0xff]
      %v567 = vld [vmem:[%s3 + $0x28] sm:$0xff]
      %v568 = vld [vmem:[%s3 + $0x30] sm:$0xff]
      %v569 = vld [vmem:[%s3 + $0x38] sm:$0xff]
      %v578 = vunpack.c.l.b16 %v562
      %v579 = vunpack.c.h.b16 %v562
      %v580 = vunpack.c.l.b16 %v563
      %v581 = vunpack.c.h.b16 %v563
      %v582 = vunpack.c.l.b16 %v564
      %v583 = vunpack.c.h.b16 %v564
      %v584 = vunpack.c.l.b16 %v565
      %v585 = vunpack.c.h.b16 %v565
      %v586 = vunpack.c.l.b16 %v566
      %v587 = vunpack.c.h.b16 %v566
      %v588 = vunpack.c.l.b16 %v567
      %v589 = vunpack.c.h.b16 %v567
      %v590 = vunpack.c.l.b16 %v568
      %v591 = vunpack.c.h.b16 %v568
      %v592 = vunpack.c.l.b16 %v569
      %v593 = vunpack.c.h.b16 %v569
      %v594 = vpack.c.b16 %v580, %v578
      %v595 = vpack.c.b16 %v581, %v579
      %v596 = vpack.c.b16 %v584, %v582
      %v597 = vpack.c.b16 %v585, %v583
      %v598 = vpack.c.b16 %v588, %v586
      %v599 = vpack.c.b16 %v589, %v587
      %v600 = vpack.c.b16 %v592, %v590
      %v601 = vpack.c.b16 %v593, %v591
      %vm610 = vcmask 523264
      %v612 = vsel %vm610, %v561, 0
      %614 = vmatprep.subr.bf16.mxu0 %v595
      %615 = vmatpush1.bf16.msra.mxu0 %v594
      %616 = vmatprep.subr.bf16.mxu0 %v597
      %617 = vmatpush1.bf16.msra.mxu0 %v596
      %618 = vmatprep.subr.bf16.mxu0 %v599
      %619 = vmatpush1.bf16.msra.mxu0 %v598
      %620 = vmatprep.subr.bf16.mxu0 %v601
      %621 = vmatpush1.bf16.msra.mxu0 %v600
      %622 = vmatprep.subr.bf16.mxu0 0
      %623 = vmatpush1.bf16.msra.mxu0 0
      %624 = vmatprep.subr.bf16.mxu0 0
      %625 = vmatpush1.bf16.msra.mxu0 0
      %626 = vmatprep.subr.bf16.mxu0 0
      %627 = vmatpush1.bf16.msra.mxu0 0
      %628 = vmatprep.subr.bf16.mxu0 0
      %629 = vmatpush1.bf16.msra.mxu0 0
      %630 = vmatprep.subr.bf16.mxu0 0
      %631 = vmatpush1.bf16.msra.mxu0 0
      %632 = vmatprep.subr.bf16.mxu0 0
      %633 = vmatpush1.bf16.msra.mxu0 0
      %634 = vmatprep.subr.bf16.mxu0 0
      %635 = vmatpush1.bf16.msra.mxu0 0
      %636 = vmatprep.subr.bf16.mxu0 0
      %637 = vmatpush1.bf16.msra.mxu0 0
      %638 = vmatprep.subr.bf16.mxu0 0
      %639 = vmatpush1.bf16.msra.mxu0 0
      %640 = vmatprep.subr.bf16.mxu0 0
      %641 = vmatpush1.bf16.msra.mxu0 0
      %642 = vmatprep.subr.bf16.mxu0 0
      %643 = vmatpush1.bf16.msra.mxu0 0
      %644 = vmatprep.subr.bf16.mxu0 0
      %645 = vmatpush1.bf16.msra.mxu0 0
      %646 = vmatprep.mubr.bf16.mxu0 0
      %647 = vmatmul.mubr.bf16.gmra.mrb[0].mxu0 %v612
      %v648 = vpop.f32.mrb[0].mxu0
      %v649 = vadd.f32 0.0, %v648
      %v650 = vpop.f32.mrb[0].mxu0
      %v651 = vadd.f32 0.0, %v650
      %v652 = vpop.f32.mrb[0].mxu0
      %v653 = vpop.f32.mrb[0].mxu0
      %654 = vdwg.mxu0
      %655 = vst [vmem:[#allocation3] sm:$0xff] 0.0
      %656 = vst [vmem:[#allocation3 + $0x8] sm:$0x7] 0.0
      %657 = vst [vmem:[#allocation3 + $0x3] sm:$0xff] %v649
      %v658 = vld [vmem:[%s4 + $0x3] sm:$0x1]
      %v659 = vlaneseq
      %v660 = vshrl.u32 %v659, 7
      %v661 = vsub.s32 0, %v660
      %v662 = vrot.slane %v658, %v661
      %v663 = vmul.f32 %v649, %v662
      %v664 = vld [vmem:[#allocation3] sm:$0xff]
      %v665 = vld [vmem:[%s4] sm:$0x1]
      %v666 = vlaneseq
      %v667 = vshrl.u32 %v666, 7
      %v668 = vsub.s32 0, %v667
      %v669 = vrot.slane %v665, %v668
      %v670 = vmul.f32 %v664, %v669
      %v671 = vadd.f32 %v663, %v670
      %v672 = vld [vmem:[#allocation3 + $0x1] sm:$0xff]
      %v673 = vld [vmem:[%s4 + $0x1] sm:$0x1]
      %v674 = vlaneseq
      %v675 = vshrl.u32 %v674, 7
      %v676 = vsub.s32 0, %v675
      %v677 = vrot.slane %v673, %v676
      %v678 = vmul.f32 %v672, %v677
      %v679 = vadd.f32 %v671, %v678
      %v680 = vld [vmem:[#allocation3 + $0x2] sm:$0xff]
      %v681 = vld [vmem:[%s4 + $0x2] sm:$0x1]
      %v682 = vlaneseq
      %v683 = vshrl.u32 %v682, 7
      %v684 = vsub.s32 0, %v683
      %v685 = vrot.slane %v681, %v684
      %v686 = vmul.f32 %v680, %v685
      %v687 = vadd.f32 %v679, %v686
      %v688 = vld [vmem:[%s5] sm:$0x1]
      %v690 = vlaneseq
      %v691 = vshrl.u32 %v690, 7
      %v692 = vsub.s32 0, %v691
      %v693 = vrot.slane %v688, %v692
      %v695 = vadd.f32 %v687, %v693
      %v696 = vxor.u32 %v695, 2147483648
      %v697 = vmul.f32 %v696, 1.442695
      %v698 = vpow.pop %v697
      %v699 = vadd.f32 %v698, 1.0
      %v700 = vrcp.pop %v699
      %v701 = vmul.f32 1.0, %v700
      %v702 = vmul.f32 %v695, %v701
      %v703 = vpack.c.bf16 %v702, %v702
      %v704 = vld [vmem:[%s6] sm:$0xff]
      %v705 = vld [vmem:[%s6 + $0x8] sm:$0xff]
      %v706 = vld [vmem:[%s6 + $0x10] sm:$0xff]
      %v707 = vld [vmem:[%s6 + $0x18] sm:$0xff]
      %v708 = vld [vmem:[%s6 + $0x20] sm:$0xff]
      %v709 = vld [vmem:[%s6 + $0x28] sm:$0xff]
      %v710 = vld [vmem:[%s6 + $0x30] sm:$0xff]
      %v711 = vld [vmem:[%s6 + $0x38] sm:$0xff]
      %v712 = vld [vmem:[%s6 + $0x40] sm:$0xff]
      %v713 = vld [vmem:[%s6 + $0x48] sm:$0xff]
      %v714 = vld [vmem:[%s6 + $0x50] sm:$0xff]
      %v715 = vld [vmem:[%s6 + $0x58] sm:$0xff]
      %v716 = vld [vmem:[%s6 + $0x60] sm:$0xff]
      %v717 = vld [vmem:[%s6 + $0x68] sm:$0xff]
      %v718 = vld [vmem:[%s6 + $0x70] sm:$0xff]
      %v719 = vld [vmem:[%s6 + $0x78] sm:$0xff]
      %v736 = vunpack.c.l.b16 %v704
      %v737 = vunpack.c.h.b16 %v704
      %v738 = vunpack.c.l.b16 %v705
      %v739 = vunpack.c.h.b16 %v705
      %v740 = vunpack.c.l.b16 %v706
      %v741 = vunpack.c.h.b16 %v706
      %v742 = vunpack.c.l.b16 %v707
      %v743 = vunpack.c.h.b16 %v707
      %v744 = vunpack.c.l.b16 %v708
      %v745 = vunpack.c.h.b16 %v708
      %v746 = vunpack.c.l.b16 %v709
      %v747 = vunpack.c.h.b16 %v709
      %v748 = vunpack.c.l.b16 %v710
      %v749 = vunpack.c.h.b16 %v710
      %v750 = vunpack.c.l.b16 %v711
      %v751 = vunpack.c.h.b16 %v711
      %v752 = vunpack.c.l.b16 %v712
      %v753 = vunpack.c.h.b16 %v712
      %v754 = vunpack.c.l.b16 %v713
      %v755 = vunpack.c.h.b16 %v713
      %v756 = vunpack.c.l.b16 %v714
      %v757 = vunpack.c.h.b16 %v714
      %v758 = vunpack.c.l.b16 %v715
      %v759 = vunpack.c.h.b16 %v715
      %v760 = vunpack.c.l.b16 %v716
      %v761 = vunpack.c.h.b16 %v716
      %v762 = vunpack.c.l.b16 %v717
      %v763 = vunpack.c.h.b16 %v717
      %v764 = vunpack.c.l.b16 %v718
      %v765 = vunpack.c.h.b16 %v718
      %v766 = vunpack.c.l.b16 %v719
      %v767 = vunpack.c.h.b16 %v719
      %v768 = vpack.c.b16 %v738, %v736
      %v769 = vpack.c.b16 %v739, %v737
      %v770 = vpack.c.b16 %v742, %v740
      %v771 = vpack.c.b16 %v743, %v741
      %v772 = vpack.c.b16 %v746, %v744
      %v773 = vpack.c.b16 %v747, %v745
      %v774 = vpack.c.b16 %v750, %v748
      %v775 = vpack.c.b16 %v751, %v749
      %v776 = vpack.c.b16 %v754, %v752
      %v777 = vpack.c.b16 %v755, %v753
      %v778 = vpack.c.b16 %v758, %v756
      %v779 = vpack.c.b16 %v759, %v757
      %v780 = vpack.c.b16 %v762, %v760
      %v781 = vpack.c.b16 %v763, %v761
      %v782 = vpack.c.b16 %v766, %v764
      %v783 = vpack.c.b16 %v767, %v765
      %800 = vmatprep.subr.bf16.mxu0 %v769
      %801 = vmatpush1.bf16.msra.mxu0 %v768
      %802 = vmatprep.subr.bf16.mxu0 %v771
      %803 = vmatpush1.bf16.msra.mxu0 %v770
      %804 = vmatprep.subr.bf16.mxu0 %v773
      %805 = vmatpush1.bf16.msra.mxu0 %v772
      %806 = vmatprep.subr.bf16.mxu0 %v775
      %807 = vmatpush1.bf16.msra.mxu0 %v774
      %808 = vmatprep.subr.bf16.mxu0 %v777
      %809 = vmatpush1.bf16.msra.mxu0 %v776
      %810 = vmatprep.subr.bf16.mxu0 %v779
      %811 = vmatpush1.bf16.msra.mxu0 %v778
      %812 = vmatprep.subr.bf16.mxu0 %v781
      %813 = vmatpush1.bf16.msra.mxu0 %v780
      %814 = vmatprep.subr.bf16.mxu0 %v783
      %815 = vmatpush1.bf16.msra.mxu0 %v782
      %816 = vmatprep.subr.bf16.mxu0 0
      %817 = vmatpush1.bf16.msra.mxu0 0
      %818 = vmatprep.subr.bf16.mxu0 0
      %819 = vmatpush1.bf16.msra.mxu0 0
      %820 = vmatprep.subr.bf16.mxu0 0
      %821 = vmatpush1.bf16.msra.mxu0 0
      %822 = vmatprep.subr.bf16.mxu0 0
      %823 = vmatpush1.bf16.msra.mxu0 0
      %824 = vmatprep.subr.bf16.mxu0 0
      %825 = vmatpush1.bf16.msra.mxu0 0
      %826 = vmatprep.subr.bf16.mxu0 0
      %827 = vmatpush1.bf16.msra.mxu0 0
      %828 = vmatprep.subr.bf16.mxu0 0
      %829 = vmatpush1.bf16.msra.mxu0 0
      %830 = vmatprep.subr.bf16.mxu0 0
      %831 = vmatpush1.bf16.msra.mxu0 0
      %832 = vmatprep.mubr.bf16.mxu0 0
      %833 = vmatmul.mubr.bf16.gmra.mrb[0].mxu0 %v703
      %v834 = vpop.f32.mrb[0].mxu0
      %v835 = vadd.f32 0.0, %v834
      %v836 = vpop.f32.mrb[0].mxu0
      %v837 = vadd.f32 0.0, %v836
      %v838 = vpop.f32.mrb[0].mxu0
      %v839 = vpop.f32.mrb[0].mxu0
      %840 = vdwg.mxu0
      %v841 = vld [vmem:[%s7] sm:$0x1]
      %v843 = vlaneseq
      %v844 = vshrl.u32 %v843, 7
      %v845 = vsub.s32 0, %v844
      %v846 = vrot.slane %v841, %v845
      %v848 = vadd.f32 %v835, %v846
      %v849 = vmax.f32 %v848, 0.0
      %vm850 = vcmp.ne.f32.partialorder %v848, %v848
      %v851 = vadd.f32 %v848, 0.0
      %v852 = vand.u32 2147483647, %v848
      %v853 = vsub.f32 0.0, %v852
      %v854 = vmul.f32 %v853, 1.442695
      %v855 = vpow.pop %v854
      %v856 = vadd.f32 %v855, 1.0
      %v857 = vlog2.pop %v856
      %v858 = vmul.f32 %v857, 0.6931472
      %v859 = vmul.f32 -0.5, %v855
      %v860 = vadd.f32 %v859, 1.0
      %v861 = vmul.f32 %v860, %v855
      %v862 = vand.u32 2147483647, %v855
      %vm863 = vcmp.lt.f32.partialorder %v862, 0.0004427343
      %v864 = vsel %vm863, %v861, %v858
      %v865 = vadd.f32 %v849, %v864
      %v866 = vsel %vm850, %v851, %v865
      %v867 = vlaneseq
      %v868 = vand.u32 %v867, 127
      %vm869 = vcmp.lt.s32.totalorder %v868, 64
      %v870 = vlaneseq
      %v871 = vshrl.u32 %v870, 7
      %v872 = vsub.s32 0, %v871
      %v873 = vrot.slane %v837, %v872
      %875 = vbcast.lane.b32.xlu0 %v873, 256
      %v876 = vpop.permute.xlu0 %875
      %s878 = sor.u32 256, 8
      %879 = vbcast.lane.b32.xlu0 %v873, %s878
      %v880 = vpop.permute.xlu0 %879
      %s882 = sor.u32 256, 16
      %883 = vbcast.lane.b32.xlu0 %v873, %s882
      %v884 = vpop.permute.xlu0 %883
      %s886 = sor.u32 256, 24
      %887 = vbcast.lane.b32.xlu0 %v873, %s886
      %v888 = vpop.permute.xlu0 %887
      %v889 = vlaneseq
      %v890 = vshrl.u32 %v889, 7
      %v891 = vsub.s32 1, %v890
      %v892 = vrot.slane %v837, %v891
      %894 = vbcast.lane.b32.xlu0 %v892, 256
      %v895 = vpop.permute.xlu0 %894
      %s897 = sor.u32 256, 8
      %898 = vbcast.lane.b32.xlu0 %v892, %s897
      %v899 = vpop.permute.xlu0 %898
      %s901 = sor.u32 256, 16
      %902 = vbcast.lane.b32.xlu0 %v892, %s901
      %v903 = vpop.permute.xlu0 %902
      %s905 = sor.u32 256, 24
      %906 = vbcast.lane.b32.xlu0 %v892, %s905
      %v907 = vpop.permute.xlu0 %906
      %v908 = vlaneseq
      %v909 = vshrl.u32 %v908, 7
      %v910 = vsub.s32 2, %v909
      %v911 = vrot.slane %v837, %v910
      %913 = vbcast.lane.b32.xlu0 %v911, 256
      %v914 = vpop.permute.xlu0 %913
      %s916 = sor.u32 256, 8
      %917 = vbcast.lane.b32.xlu0 %v911, %s916
      %v918 = vpop.permute.xlu0 %917
      %s920 = sor.u32 256, 16
      %921 = vbcast.lane.b32.xlu0 %v911, %s920
      %v922 = vpop.permute.xlu0 %921
      %s924 = sor.u32 256, 24
      %925 = vbcast.lane.b32.xlu0 %v911, %s924
      %v926 = vpop.permute.xlu0 %925
      %v927 = vlaneseq
      %v928 = vshrl.u32 %v927, 7
      %v929 = vsub.s32 3, %v928
      %v930 = vrot.slane %v837, %v929
      %932 = vbcast.lane.b32.xlu0 %v930, 256
      %v933 = vpop.permute.xlu0 %932
      %s935 = sor.u32 256, 8
      %936 = vbcast.lane.b32.xlu0 %v930, %s935
      %v937 = vpop.permute.xlu0 %936
      %s939 = sor.u32 256, 16
      %940 = vbcast.lane.b32.xlu0 %v930, %s939
      %v941 = vpop.permute.xlu0 %940
      %s943 = sor.u32 256, 24
      %944 = vbcast.lane.b32.xlu0 %v930, %s943
      %v945 = vpop.permute.xlu0 %944
      %v946 = vlaneseq
      %v947 = vshrl.u32 %v946, 7
      %v948 = vsub.s32 4, %v947
      %v949 = vrot.slane %v837, %v948
      %951 = vbcast.lane.b32.xlu0 %v949, 256
      %v952 = vpop.permute.xlu0 %951
      %s954 = sor.u32 256, 8
      %955 = vbcast.lane.b32.xlu0 %v949, %s954
      %v956 = vpop.permute.xlu0 %955
      %s958 = sor.u32 256, 16
      %959 = vbcast.lane.b32.xlu0 %v949, %s958
      %v960 = vpop.permute.xlu0 %959
      %s962 = sor.u32 256, 24
      %963 = vbcast.lane.b32.xlu0 %v949, %s962
      %v964 = vpop.permute.xlu0 %963
      %v965 = vlaneseq
      %v966 = vshrl.u32 %v965, 7
      %v967 = vsub.s32 5, %v966
      %v968 = vrot.slane %v837, %v967
      %970 = vbcast.lane.b32.xlu0 %v968, 256
      %v971 = vpop.permute.xlu0 %970
      %s973 = sor.u32 256, 8
      %974 = vbcast.lane.b32.xlu0 %v968, %s973
      %v975 = vpop.permute.xlu0 %974
      %s977 = sor.u32 256, 16
      %978 = vbcast.lane.b32.xlu0 %v968, %s977
      %v979 = vpop.permute.xlu0 %978
      %s981 = sor.u32 256, 24
      %982 = vbcast.lane.b32.xlu0 %v968, %s981
      %v983 = vpop.permute.xlu0 %982
      %v984 = vlaneseq
      %v985 = vshrl.u32 %v984, 7
      %v986 = vsub.s32 6, %v985
      %v987 = vrot.slane %v837, %v986
      %989 = vbcast.lane.b32.xlu0 %v987, 256
      %v990 = vpop.permute.xlu0 %989
      %s992 = sor.u32 256, 8
      %993 = vbcast.lane.b32.xlu0 %v987, %s992
      %v994 = vpop.permute.xlu0 %993
      %s996 = sor.u32 256, 16
      %997 = vbcast.lane.b32.xlu0 %v987, %s996
      %v998 = vpop.permute.xlu0 %997
      %s1000 = sor.u32 256, 24
      %1001 = vbcast.lane.b32.xlu0 %v987, %s1000
      %v1002 = vpop.permute.xlu0 %1001
      %v1003 = vlaneseq
      %v1004 = vshrl.u32 %v1003, 7
      %v1005 = vsub.s32 7, %v1004
      %v1006 = vrot.slane %v837, %v1005
      %1008 = vbcast.lane.b32.xlu0 %v1006, 256
      %v1009 = vpop.permute.xlu0 %1008
      %s1011 = sor.u32 256, 8
      %1012 = vbcast.lane.b32.xlu0 %v1006, %s1011
      %v1013 = vpop.permute.xlu0 %1012
      %s1015 = sor.u32 256, 16
      %1016 = vbcast.lane.b32.xlu0 %v1006, %s1015
      %v1017 = vpop.permute.xlu0 %1016
      %s1019 = sor.u32 256, 24
      %1020 = vbcast.lane.b32.xlu0 %v1006, %s1019
      %v1021 = vpop.permute.xlu0 %1020
      %v1022 = vsel %vm869, %v876, %v880
      %v1023 = vsel %vm869, %v895, %v899
      %v1024 = vsel %vm869, %v914, %v918
      %v1025 = vsel %vm869, %v933, %v937
      %v1026 = vsel %vm869, %v952, %v956
      %v1027 = vsel %vm869, %v971, %v975
      %v1028 = vsel %vm869, %v990, %v994
      %v1029 = vsel %vm869, %v1009, %v1013
      %v1030 = vsel %vm869, %v884, %v888
      %v1031 = vsel %vm869, %v903, %v907
      %v1032 = vsel %vm869, %v922, %v926
      %v1033 = vsel %vm869, %v941, %v945
      %v1034 = vsel %vm869, %v960, %v964
      %v1035 = vsel %vm869, %v979, %v983
      %v1036 = vsel %vm869, %v998, %v1002
      %v1037 = vsel %vm869, %v1017, %v1021
      %v1039 = vcombine.high %v866, %v866
      %v1041 = vunpack.c.l.s4 1966171168
      %v1042 = vunpack.c.0.s8 %v1041
      %v1043 = vlaneseq
      %v1044 = vshrl.u32 %v1043, 7
      %v1045 = vsub.s32 %v1042, %v1044
      %v1046 = vrot.slane %v866, %v1045
      %v1048 = vunpack.c.l.s4 1966171168
      %v1049 = vunpack.c.0.s8 %v1048
      %v1050 = vlaneseq
      %v1051 = vshrl.u32 %v1050, 7
      %v1052 = vsub.s32 %v1049, %v1051
      %v1053 = vrot.slane %v1039, %v1052
      %v1054 = vcombine.high %v1046, %v1046
      %v1055 = vcombine.high %v1053, %v1053
      %v1057 = vunpack.c.l.s4 1966171168
      %v1058 = vunpack.c.0.s8 %v1057
      %v1059 = vlaneseq
      %v1060 = vshrl.u32 %v1059, 7
      %v1061 = vsub.s32 %v1058, %v1060
      %v1062 = vrot.slane %v1046, %v1061
      %v1064 = vunpack.c.l.s4 1966171168
      %v1065 = vunpack.c.0.s8 %v1064
      %v1066 = vlaneseq
      %v1067 = vshrl.u32 %v1066, 7
      %v1068 = vsub.s32 %v1065, %v1067
      %v1069 = vrot.slane %v1053, %v1068
      %v1071 = vunpack.c.l.s4 1966171168
      %v1072 = vunpack.c.0.s8 %v1071
      %v1073 = vlaneseq
      %v1074 = vshrl.u32 %v1073, 7
      %v1075 = vsub.s32 %v1072, %v1074
      %v1076 = vrot.slane %v1054, %v1075
      %v1078 = vunpack.c.l.s4 1966171168
      %v1079 = vunpack.c.0.s8 %v1078
      %v1080 = vlaneseq
      %v1081 = vshrl.u32 %v1080, 7
      %v1082 = vsub.s32 %v1079, %v1081
      %v1083 = vrot.slane %v1055, %v1082
      %v1084 = vcombine.high %v1062, %v1062
      %v1085 = vcombine.high %v1069, %v1069
      %v1086 = vcombine.high %v1076, %v1076
      %v1087 = vcombine.high %v1083, %v1083
      %v1088 = vld [vmem:[%s8] sm:$0xff]
      %v1089 = vlaneseq
      %v1090 = vshrl.u32 %v1089, 7
      %v1091 = vsub.s32 0, %v1090
      %v1092 = vrot.slane %v1062, %v1091
      %v1093 = vlaneseq
      %v1094 = vshrl.u32 %v1093, 7
      %v1095 = vsub.s32 0, %v1094
      %v1096 = vrot.slane %v1076, %v1095
      %v1097 = vlaneseq
      %v1098 = vshrl.u32 %v1097, 7
      %v1099 = vsub.s32 0, %v1098
      %v1100 = vrot.slane %v1084, %v1099
      %v1101 = vlaneseq
      %v1102 = vshrl.u32 %v1101, 7
      %v1103 = vsub.s32 0, %v1102
      %v1104 = vrot.slane %v1086, %v1103
      %v1105 = vlaneseq
      %v1106 = vshrl.u32 %v1105, 7
      %v1107 = vsub.s32 0, %v1106
      %v1108 = vrot.slane %v1069, %v1107
      %v1109 = vlaneseq
      %v1110 = vshrl.u32 %v1109, 7
      %v1111 = vsub.s32 0, %v1110
      %v1112 = vrot.slane %v1083, %v1111
      %v1113 = vlaneseq
      %v1114 = vshrl.u32 %v1113, 7
      %v1115 = vsub.s32 0, %v1114
      %v1116 = vrot.slane %v1085, %v1115
      %v1117 = vlaneseq
      %v1118 = vshrl.u32 %v1117, 7
      %v1119 = vsub.s32 0, %v1118
      %v1120 = vrot.slane %v1087, %v1119
      %v1129 = vmul.f32 %v1092, %v1088
      %v1130 = vmul.f32 %v1096, %v1088
      %v1131 = vmul.f32 %v1100, %v1088
      %v1132 = vmul.f32 %v1104, %v1088
      %v1133 = vmul.f32 %v1108, %v1088
      %v1134 = vmul.f32 %v1112, %v1088
      %v1135 = vmul.f32 %v1116, %v1088
      %v1136 = vmul.f32 %v1120, %v1088
      %v1137 = vmul.f32 %v1129, 1.442695
      %v1138 = vpow.pop %v1137
      %v1139 = vmul.f32 %v1130, 1.442695
      %v1140 = vpow.pop %v1139
      %v1141 = vmul.f32 %v1131, 1.442695
      %v1142 = vpow.pop %v1141
      %v1143 = vmul.f32 %v1132, 1.442695
      %v1144 = vpow.pop %v1143
      %v1145 = vmul.f32 %v1133, 1.442695
      %v1146 = vpow.pop %v1145
      %v1147 = vmul.f32 %v1134, 1.442695
      %v1148 = vpow.pop %v1147
      %v1149 = vmul.f32 %v1135, 1.442695
      %v1150 = vpow.pop %v1149
      %v1151 = vmul.f32 %v1136, 1.442695
      %v1152 = vpow.pop %v1151
      %1153 = vst [vmem:[#allocation4] sm:$0xff] %v1138
      %1154 = vst [vmem:[#allocation4 + $0x8] sm:$0xff] %v1140
      %1155 = vst [vmem:[#allocation4 + $0x10] sm:$0xff] %v1142
      %1156 = vst [vmem:[#allocation4 + $0x18] sm:$0xff] %v1144
      %1157 = vst [vmem:[#allocation4 + $0x20] sm:$0xff] %v1146
      %1158 = vst [vmem:[#allocation4 + $0x28] sm:$0xff] %v1148
      %1159 = vst [vmem:[#allocation4 + $0x30] sm:$0xff] %v1150
      %1160 = vst [vmem:[#allocation4 + $0x38] sm:$0xff] %v1152
      %v1161 = vmul.f32 %v866, %v702
      %v1163 = vcombine.high %v1161, %v1161
      %v1165 = vunpack.c.l.s4 1966171168
      %v1166 = vunpack.c.0.s8 %v1165
      %v1167 = vlaneseq
      %v1168 = vshrl.u32 %v1167, 7
      %v1169 = vsub.s32 %v1166, %v1168
      %v1170 = vrot.slane %v1161, %v1169
      %v1172 = vunpack.c.l.s4 1966171168
      %v1173 = vunpack.c.0.s8 %v1172
      %v1174 = vlaneseq
      %v1175 = vshrl.u32 %v1174, 7
      %v1176 = vsub.s32 %v1173, %v1175
      %v1177 = vrot.slane %v1163, %v1176
      %v1178 = vcombine.high %v1170, %v1170
      %v1179 = vcombine.high %v1177, %v1177
      %v1181 = vunpack.c.l.s4 1966171168
      %v1182 = vunpack.c.0.s8 %v1181
      %v1183 = vlaneseq
      %v1184 = vshrl.u32 %v1183, 7
      %v1185 = vsub.s32 %v1182, %v1184
      %v1186 = vrot.slane %v1170, %v1185
      %v1188 = vunpack.c.l.s4 1966171168
      %v1189 = vunpack.c.0.s8 %v1188
      %v1190 = vlaneseq
      %v1191 = vshrl.u32 %v1190, 7
      %v1192 = vsub.s32 %v1189, %v1191
      %v1193 = vrot.slane %v1177, %v1192
      %v1195 = vunpack.c.l.s4 1966171168
      %v1196 = vunpack.c.0.s8 %v1195
      %v1197 = vlaneseq
      %v1198 = vshrl.u32 %v1197, 7
      %v1199 = vsub.s32 %v1196, %v1198
      %v1200 = vrot.slane %v1178, %v1199
      %v1202 = vunpack.c.l.s4 1966171168
      %v1203 = vunpack.c.0.s8 %v1202
      %v1204 = vlaneseq
      %v1205 = vshrl.u32 %v1204, 7
      %v1206 = vsub.s32 %v1203, %v1205
      %v1207 = vrot.slane %v1179, %v1206
      %v1208 = vcombine.high %v1186, %v1186
      %v1209 = vcombine.high %v1193, %v1193
      %v1210 = vcombine.high %v1200, %v1200
      %v1211 = vcombine.high %v1207, %v1207
      %v1212 = vlaneseq
      %v1213 = vshrl.u32 %v1212, 7
      %v1214 = vsub.s32 0, %v1213
      %v1215 = vrot.slane %v1186, %v1214
      %v1216 = vlaneseq
      %v1217 = vshrl.u32 %v1216, 7
      %v1218 = vsub.s32 0, %v1217
      %v1219 = vrot.slane %v1200, %v1218
      %v1220 = vlaneseq
      %v1221 = vshrl.u32 %v1220, 7
      %v1222 = vsub.s32 0, %v1221
      %v1223 = vrot.slane %v1208, %v1222
      %v1224 = vlaneseq
      %v1225 = vshrl.u32 %v1224, 7
      %v1226 = vsub.s32 0, %v1225
      %v1227 = vrot.slane %v1210, %v1226
      %v1228 = vlaneseq
      %v1229 = vshrl.u32 %v1228, 7
      %v1230 = vsub.s32 0, %v1229
      %v1231 = vrot.slane %v1193, %v1230
      %v1232 = vlaneseq
      %v1233 = vshrl.u32 %v1232, 7
      %v1234 = vsub.s32 0, %v1233
      %v1235 = vrot.slane %v1207, %v1234
      %v1236 = vlaneseq
      %v1237 = vshrl.u32 %v1236, 7
      %v1238 = vsub.s32 0, %v1237
      %v1239 = vrot.slane %v1209, %v1238
      %v1240 = vlaneseq
      %v1241 = vshrl.u32 %v1240, 7
      %v1242 = vsub.s32 0, %v1241
      %v1243 = vrot.slane %v1211, %v1242
      %v1252 = vmul.f32 %v1022, %v1215
      %v1253 = vmul.f32 %v1023, %v1219
      %v1254 = vmul.f32 %v1024, %v1223
      %v1255 = vmul.f32 %v1025, %v1227
      %v1256 = vmul.f32 %v1026, %v1231
      %v1257 = vmul.f32 %v1027, %v1235
      %v1258 = vmul.f32 %v1028, %v1239
      %v1259 = vmul.f32 %v1029, %v1243
      %1260 = vst [vmem:[#allocation5] sm:$0xff] %v1252
      %1261 = vst [vmem:[#allocation5 + $0x8] sm:$0xff] %v1253
      %1262 = vst [vmem:[#allocation5 + $0x10] sm:$0xff] %v1254
      %1263 = vst [vmem:[#allocation5 + $0x18] sm:$0xff] %v1255
      %1264 = vst [vmem:[#allocation5 + $0x20] sm:$0xff] %v1256
      %1265 = vst [vmem:[#allocation5 + $0x28] sm:$0xff] %v1257
      %1266 = vst [vmem:[#allocation5 + $0x30] sm:$0xff] %v1258
      %1267 = vst [vmem:[#allocation5 + $0x38] sm:$0xff] %v1259
      %1268 = vst [vmem:[#allocation6] sm:$0xff] %v1030
      %1269 = vst [vmem:[#allocation6 + $0x8] sm:$0xff] %v1031
      %1270 = vst [vmem:[#allocation6 + $0x10] sm:$0xff] %v1032
      %1271 = vst [vmem:[#allocation6 + $0x18] sm:$0xff] %v1033
      %1272 = vst [vmem:[#allocation6 + $0x20] sm:$0xff] %v1034
      %1273 = vst [vmem:[#allocation6 + $0x28] sm:$0xff] %v1035
      %1274 = vst [vmem:[#allocation6 + $0x30] sm:$0xff] %v1036
      %1275 = vst [vmem:[#allocation6 + $0x38] sm:$0xff] %v1037
      %v1276 = vlaneseq
      %v1277 = vshrl.u32 %v1276, 7
      %v1278 = vld [vmem:[#allocation4] sm:$0xff]
      %v1279 = vmul.f32 %v1278, 0.0
      %v1280 = vld [vmem:[#allocation5] sm:$0xff]
      %v1281 = vadd.f32 %v1279, %v1280
      %v1282 = vld [vmem:[#allocation6] sm:$0xff]
      %v1283 = vmul.f32 %v1281, %v1282
      %v1284 = vrot.slane %v1283, 4
      %v1285 = vadd.f32 %v1283, %v1284
      %v1286 = vrot.slane %v1285, 2
      %v1287 = vadd.f32 %v1285, %v1286
      %v1288 = vrot.slane %v1287, 1
      %v1289 = vadd.f32 %v1287, %v1288
      %vm1290 = vcmp.eq.s32.totalorder %v1277, 0
      %v1291 = vsel %vm1290, 1, 0
      %vm1292 = vcmp.eq.s32.totalorder %v1291, 1
      %v1293 = vsel %vm1292, %v1289, 0.0
      %v1294 = vadd.f32 %v1293, 0.0
      %s1295 = scalar_lea.vmem [#allocation4], 8
      %v1296 = vld [vmem:[%s1295] sm:$0xff]
      %v1297 = vmul.f32 %v1296, %v1281
      %s1298 = scalar_lea.vmem [#allocation5], 8
      %v1299 = vld [vmem:[%s1298] sm:$0xff]
      %v1300 = vadd.f32 %v1297, %v1299
      %s1301 = scalar_lea.vmem [#allocation6], 8
      %v1302 = vld [vmem:[%s1301] sm:$0xff]
      %v1303 = vmul.f32 %v1300, %v1302
      %v1304 = vrot.slane %v1303, 4
      %v1305 = vadd.f32 %v1303, %v1304
      %v1306 = vrot.slane %v1305, 2
      %v1307 = vadd.f32 %v1305, %v1306
      %v1308 = vrot.slane %v1307, 1
      %v1309 = vadd.f32 %v1307, %v1308
      %vm1310 = vcmp.eq.s32.totalorder %v1277, 1
      %v1311 = vsel %vm1310, 1, 0
      %vm1312 = vcmp.eq.s32.totalorder %v1311, 1
      %v1313 = vsel %vm1312, %v1309, 0.0
      %v1314 = vadd.f32 %v1294, %v1313
      %s1315 = scalar_lea.vmem [#allocation4], 16
      %v1316 = vld [vmem:[%s1315] sm:$0xff]
      %v1317 = vmul.f32 %v1316, %v1300
      %s1318 = scalar_lea.vmem [#allocation5], 16
      %v1319 = vld [vmem:[%s1318] sm:$0xff]
      %v1320 = vadd.f32 %v1317, %v1319
      %s1321 = scalar_lea.vmem [#allocation6], 16
      %v1322 = vld [vmem:[%s1321] sm:$0xff]
      %v1323 = vmul.f32 %v1320, %v1322
      %v1324 = vrot.slane %v1323, 4
      %v1325 = vadd.f32 %v1323, %v1324
      %v1326 = vrot.slane %v1325, 2
      %v1327 = vadd.f32 %v1325, %v1326
      %v1328 = vrot.slane %v1327, 1
      %v1329 = vadd.f32 %v1327, %v1328
      %vm1330 = vcmp.eq.s32.totalorder %v1277, 2
      %v1331 = vsel %vm1330, 1, 0
      %vm1332 = vcmp.eq.s32.totalorder %v1331, 1
      %v1333 = vsel %vm1332, %v1329, 0.0
      %v1334 = vadd.f32 %v1314, %v1333
      %s1335 = scalar_lea.vmem [#allocation4], 24
      %v1336 = vld [vmem:[%s1335] sm:$0xff]
      %v1337 = vmul.f32 %v1336, %v1320
      %s1338 = scalar_lea.vmem [#allocation5], 24
      %v1339 = vld [vmem:[%s1338] sm:$0xff]
      %v1340 = vadd.f32 %v1337, %v1339
      %s1341 = scalar_lea.vmem [#allocation6], 24
      %v1342 = vld [vmem:[%s1341] sm:$0xff]
      %v1343 = vmul.f32 %v1340, %v1342
      %v1344 = vrot.slane %v1343, 4
      %v1345 = vadd.f32 %v1343, %v1344
      %v1346 = vrot.slane %v1345, 2
      %v1347 = vadd.f32 %v1345, %v1346
      %v1348 = vrot.slane %v1347, 1
      %v1349 = vadd.f32 %v1347, %v1348
      %vm1350 = vcmp.eq.s32.totalorder %v1277, 3
      %v1351 = vsel %vm1350, 1, 0
      %vm1352 = vcmp.eq.s32.totalorder %v1351, 1
      %v1353 = vsel %vm1352, %v1349, 0.0
      %v1354 = vadd.f32 %v1334, %v1353
      %s1355 = scalar_lea.vmem [#allocation4], 32
      %v1356 = vld [vmem:[%s1355] sm:$0xff]
      %v1357 = vmul.f32 %v1356, %v1340
      %s1358 = scalar_lea.vmem [#allocation5], 32
      %v1359 = vld [vmem:[%s1358] sm:$0xff]
      %v1360 = vadd.f32 %v1357, %v1359
      %s1361 = scalar_lea.vmem [#allocation6], 32
      %v1362 = vld [vmem:[%s1361] sm:$0xff]
      %v1363 = vmul.f32 %v1360, %v1362
      %v1364 = vrot.slane %v1363, 4
      %v1365 = vadd.f32 %v1363, %v1364
      %v1366 = vrot.slane %v1365, 2
      %v1367 = vadd.f32 %v1365, %v1366
      %v1368 = vrot.slane %v1367, 1
      %v1369 = vadd.f32 %v1367, %v1368
      %vm1370 = vcmp.eq.s32.totalorder %v1277, 4
      %v1371 = vsel %vm1370, 1, 0
      %vm1372 = vcmp.eq.s32.totalorder %v1371, 1
      %v1373 = vsel %vm1372, %v1369, 0.0
      %v1374 = vadd.f32 %v1354, %v1373
      %s1375 = scalar_lea.vmem [#allocation4], 40
      %v1376 = vld [vmem:[%s1375] sm:$0xff]
      %v1377 = vmul.f32 %v1376, %v1360
      %s1378 = scalar_lea.vmem [#allocation5], 40
      %v1379 = vld [vmem:[%s1378] sm:$0xff]
      %v1380 = vadd.f32 %v1377, %v1379
      %s1381 = scalar_lea.vmem [#allocation6], 40
      %v1382 = vld [vmem:[%s1381] sm:$0xff]
      %v1383 = vmul.f32 %v1380, %v1382
      %v1384 = vrot.slane %v1383, 4
      %v1385 = vadd.f32 %v1383, %v1384
      %v1386 = vrot.slane %v1385, 2
      %v1387 = vadd.f32 %v1385, %v1386
      %v1388 = vrot.slane %v1387, 1
      %v1389 = vadd.f32 %v1387, %v1388
      %vm1390 = vcmp.eq.s32.totalorder %v1277, 5
      %v1391 = vsel %vm1390, 1, 0
      %vm1392 = vcmp.eq.s32.totalorder %v1391, 1
      %v1393 = vsel %vm1392, %v1389, 0.0
      %v1394 = vadd.f32 %v1374, %v1393
      %s1395 = scalar_lea.vmem [#allocation4], 48
      %v1396 = vld [vmem:[%s1395] sm:$0xff]
      %v1397 = vmul.f32 %v1396, %v1380
      %s1398 = scalar_lea.vmem [#allocation5], 48
      %v1399 = vld [vmem:[%s1398] sm:$0xff]
      %v1400 = vadd.f32 %v1397, %v1399
      %s1401 = scalar_lea.vmem [#allocation6], 48
      %v1402 = vld [vmem:[%s1401] sm:$0xff]
      %v1403 = vmul.f32 %v1400, %v1402
      %v1404 = vrot.slane %v1403, 4
      %v1405 = vadd.f32 %v1403, %v1404
      %v1406 = vrot.slane %v1405, 2
      %v1407 = vadd.f32 %v1405, %v1406
      %v1408 = vrot.slane %v1407, 1
      %v1409 = vadd.f32 %v1407, %v1408
      %vm1410 = vcmp.eq.s32.totalorder %v1277, 6
      %v1411 = vsel %vm1410, 1, 0
      %vm1412 = vcmp.eq.s32.totalorder %v1411, 1
      %v1413 = vsel %vm1412, %v1409, 0.0
      %v1414 = vadd.f32 %v1394, %v1413
      %s1415 = scalar_lea.vmem [#allocation4], 56
      %v1416 = vld [vmem:[%s1415] sm:$0xff]
      %v1417 = vmul.f32 %v1416, %v1400
      %s1418 = scalar_lea.vmem [#allocation5], 56
      %v1419 = vld [vmem:[%s1418] sm:$0xff]
      %v1420 = vadd.f32 %v1417, %v1419
      %s1421 = scalar_lea.vmem [#allocation6], 56
      %v1422 = vld [vmem:[%s1421] sm:$0xff]
      %v1423 = vmul.f32 %v1420, %v1422
      %v1424 = vrot.slane %v1423, 4
      %v1425 = vadd.f32 %v1423, %v1424
      %v1426 = vrot.slane %v1425, 2
      %v1427 = vadd.f32 %v1425, %v1426
      %v1428 = vrot.slane %v1427, 1
      %v1429 = vadd.f32 %v1427, %v1428
      %vm1430 = vcmp.eq.s32.totalorder %v1277, 7
      %v1431 = vsel %vm1430, 1, 0
      %vm1432 = vcmp.eq.s32.totalorder %v1431, 1
      %v1433 = vsel %vm1432, %v1429, 0.0
      %v1434 = vadd.f32 %v1414, %v1433
      %v1435 = vld [vmem:[%s9] sm:$0x1]
      %v1437 = vlaneseq
      %v1438 = vshrl.u32 %v1437, 7
      %v1439 = vsub.s32 0, %v1438
      %v1440 = vrot.slane %v1435, %v1439
      %v1442 = vmul.f32 %v1440, %v702
      %v1443 = vadd.f32 %v1434, %v1442
      %v1444 = vxor.u32 %v651, 2147483648
      %v1445 = vmul.f32 %v1444, 1.442695
      %v1446 = vpow.pop %v1445
      %v1447 = vadd.f32 %v1446, 1.0
      %v1448 = vrcp.pop %v1447
      %v1449 = vmul.f32 1.0, %v1448
      %v1450 = vmul.f32 %v651, %v1449
      %v1451 = vmul.f32 %v1443, %v1450
      %v1452 = vpack.c.bf16 %v1451, %v1451
      %v1453 = vld [vmem:[%s10] sm:$0xf]
      %v1454 = vld [vmem:[%s10 + $0x4] sm:$0xf]
      %v1455 = vld [vmem:[%s10 + $0x8] sm:$0xf]
      %v1456 = vld [vmem:[%s10 + $0xc] sm:$0xf]
      %v1457 = vld [vmem:[%s10 + $0x10] sm:$0xf]
      %v1458 = vld [vmem:[%s10 + $0x14] sm:$0xf]
      %v1459 = vld [vmem:[%s10 + $0x18] sm:$0xf]
      %v1460 = vld [vmem:[%s10 + $0x1c] sm:$0xf]
      %v1461 = vld [vmem:[%s10 + $0x20] sm:$0xf]
      %v1462 = vld [vmem:[%s10 + $0x24] sm:$0xf]
      %v1463 = vld [vmem:[%s10 + $0x28] sm:$0xf]
      %v1464 = vld [vmem:[%s10 + $0x2c] sm:$0xf]
      %v1465 = vld [vmem:[%s10 + $0x30] sm:$0xf]
      %v1466 = vld [vmem:[%s10 + $0x34] sm:$0xf]
      %v1467 = vld [vmem:[%s10 + $0x38] sm:$0xf]
      %v1468 = vld [vmem:[%s10 + $0x3c] sm:$0xf]
      %v1485 = vunpack.c.l.b16 %v1453
      %v1486 = vunpack.c.l.b16 %v1454
      %v1487 = vunpack.c.l.b16 %v1455
      %v1488 = vunpack.c.l.b16 %v1456
      %v1489 = vunpack.c.l.b16 %v1457
      %v1490 = vunpack.c.l.b16 %v1458
      %v1491 = vunpack.c.l.b16 %v1459
      %v1492 = vunpack.c.l.b16 %v1460
      %v1493 = vunpack.c.l.b16 %v1461
      %v1494 = vunpack.c.l.b16 %v1462
      %v1495 = vunpack.c.l.b16 %v1463
      %v1496 = vunpack.c.l.b16 %v1464
      %v1497 = vunpack.c.l.b16 %v1465
      %v1498 = vunpack.c.l.b16 %v1466
      %v1499 = vunpack.c.l.b16 %v1467
      %v1500 = vunpack.c.l.b16 %v1468
      %v1501 = vpack.c.b16 %v1486, %v1485
      %v1502 = vpack.c.b16 %v1488, %v1487
      %v1503 = vpack.c.b16 %v1490, %v1489
      %v1504 = vpack.c.b16 %v1492, %v1491
      %v1505 = vpack.c.b16 %v1494, %v1493
      %v1506 = vpack.c.b16 %v1496, %v1495
      %v1507 = vpack.c.b16 %v1498, %v1497
      %v1508 = vpack.c.b16 %v1500, %v1499
      %1517 = vmatprep.subr.bf16.mxu0 0
      %1518 = vmatpush1.bf16.msra.mxu0 %v1501
      %1519 = vmatprep.subr.bf16.mxu0 0
      %1520 = vmatpush1.bf16.msra.mxu0 %v1502
      %1521 = vmatprep.subr.bf16.mxu0 0
      %1522 = vmatpush1.bf16.msra.mxu0 %v1503
      %1523 = vmatprep.subr.bf16.mxu0 0
      %1524 = vmatpush1.bf16.msra.mxu0 %v1504
      %1525 = vmatprep.subr.bf16.mxu0 0
      %1526 = vmatpush1.bf16.msra.mxu0 %v1505
      %1527 = vmatprep.subr.bf16.mxu0 0
      %1528 = vmatpush1.bf16.msra.mxu0 %v1506
      %1529 = vmatprep.subr.bf16.mxu0 0
      %1530 = vmatpush1.bf16.msra.mxu0 %v1507
      %1531 = vmatprep.subr.bf16.mxu0 0
      %1532 = vmatpush1.bf16.msra.mxu0 %v1508
      %1533 = vmatprep.subr.bf16.mxu0 0
      %1534 = vmatpush1.bf16.msra.mxu0 0
      %1535 = vmatprep.subr.bf16.mxu0 0
      %1536 = vmatpush1.bf16.msra.mxu0 0
      %1537 = vmatprep.subr.bf16.mxu0 0
      %1538 = vmatpush1.bf16.msra.mxu0 0
      %1539 = vmatprep.subr.bf16.mxu0 0
      %1540 = vmatpush1.bf16.msra.mxu0 0
      %1541 = vmatprep.subr.bf16.mxu0 0
      %1542 = vmatpush1.bf16.msra.mxu0 0
      %1543 = vmatprep.subr.bf16.mxu0 0
      %1544 = vmatpush1.bf16.msra.mxu0 0
      %1545 = vmatprep.subr.bf16.mxu0 0
      %1546 = vmatpush1.bf16.msra.mxu0 0
      %1547 = vmatprep.subr.bf16.mxu0 0
      %1548 = vmatpush1.bf16.msra.mxu0 0
      %1549 = vmatprep.mubr.bf16.mxu0 0
      %1550 = vmatmul.mubr.bf16.gmra.mrb[0].mxu0 %v1452
      %v1551 = vpop.f32.mrb[0].mxu0
      %v1552 = vadd.f32 0.0, %v1551
      %v1553 = vpop.f32.mrb[0].mxu0
      %v1554 = vpop.f32.mrb[0].mxu0
      %v1555 = vpop.f32.mrb[0].mxu0
      %1556 = vdwg.mxu0
      %vm1557 = vcmp.lt.s32.totalorder %v868, 32
      %v1558 = vsel %vm1557, 1, 0
      %vm1559 = vcmp.eq.s32.totalorder %v1558, 1
      %v1560 = vsel %vm1559, %v1552, 0.0
      %v1561 = vsel %vm610, %v1560, 0.0
      %1562 = vadd.xlane.f32.xlu0 %v1561
      %v1563 = vpop.xlane.xlu0 %1562
      %v1564 = vsel %vm1559, 0.0, %v1552
      %v1565 = vsel %vm610, %v1564, 0.0
      %1566 = vadd.xlane.f32.xlu0 %v1565
      %v1567 = vpop.xlane.xlu0 %1566
      %v1568 = vsel %vm1559, %v1563, %v1567
      %v1569 = vmul.f32 %v1568, 0.03125
      %v1570 = vsub.f32 %v1552, %v1569
      %v1571 = vmul.f32 %v1570, %v1570
      %v1572 = vsel %vm1559, %v1571, 0.0
      %v1573 = vsel %vm610, %v1572, 0.0
      %1574 = vadd.xlane.f32.xlu0 %v1573
      %v1575 = vpop.xlane.xlu0 %1574
      %v1576 = vsel %vm1559, 0.0, %v1571
      %v1577 = vsel %vm610, %v1576, 0.0
      %1578 = vadd.xlane.f32.xlu0 %v1577
      %v1579 = vpop.xlane.xlu0 %1578
      %v1580 = vsel %vm1559, %v1575, %v1579
      %v1581 = vmul.f32 %v1580, 0.03125
      %v1582 = vadd.f32 %v1581, 1e-06
      %v1583 = vrsqrt.pop %v1582
      %v1584 = vmul.f32 %v1570, %v1583
      %v1585 = vld [vmem:[%s11] sm:$0x1]
      %v1587 = vlaneseq
      %v1588 = vshrl.u32 %v1587, 7
      %v1589 = vsub.s32 0, %v1588
      %v1590 = vrot.slane %v1585, %v1589
      %v1592 = vmul.f32 %v1584, %v1590
      %v1593 = vadd.f32 %v560, %v1592
      %v1594 = vld [vmem:[%s12] sm:$0x1]
      %v1596 = vlaneseq
      %v1597 = vshrl.u32 %v1596, 7
      %v1598 = vsub.s32 0, %v1597
      %v1599 = vrot.slane %v1594, %v1598
      %v1601 = vadd.f32 %v1593, %v1599
      %v1602 = vpack.c.bf16 %v1601, %v1601
      %vm1603 = vcmask 519168
      %1604 = vst.msk [vmem:[%s435] sm:$0xf] %vm1603, %v1602
      %p1605 = scmp.lt.s32.totalorder %s24, 1
      %s1606 = scalar_select %p1605, %s24, 1
      %s1607 = smul.addr %s1606, 4
      %s1608 = scalar_lea.vmem %s13, %s1607
      // Predicated region
      $region73: #{cossm_forward.1} parent=71 // pred_check
        %p1609 = pneg %p320
      $region74: #{cossm_forward.1} parent=71 // pred_check_branch
        %1611 = sbr.rel (%p1609) target = $region76
      $region75: #{cossm_forward.1} parent=71 // pred_region
        _
      $region76: #{cossm_forward.1} parent=71 // pred_fallthru
        _
    $region72: #{cossm_forward.1} parent=5 // pred_fallthru
      _
    %p1612 = scmp.le.s32.totalorder 2, %s19
    // Predicated region
    $region77: #{cossm_forward.1} parent=5 // pred_check
      %p1613 = pneg %p1612
    $region78: #{cossm_forward.1} parent=5 // pred_check_branch
      %1615 = sbr.rel (%p1613) target = $region80
    $region79: #{cossm_forward.1} parent=5 // pred_region
      %s1616 = ssub.s32 %s19, 2
      // Predicated region
      $region81: #{cossm_forward.1} parent=79 // pred_check
        %p1617 = pneg %p326
      $region82: #{cossm_forward.1} parent=79 // pred_check_branch
        %1619 = sbr.rel (%p1617) target = $region84
      $region83: #{cossm_forward.1} parent=79 // pred_region
        %p1620 = scmp.lt.s32.totalorder %s25, 1
        %s1621 = scalar_select %p1620, %s25, 1
        %s1622 = smul.addr %s1621, 4
        %s1623 = scalar_lea.vmem %s13, %s1622
      $region84: #{cossm_forward.1} parent=79 // pred_fallthru
        _
    $region80: #{cossm_forward.1} parent=5 // pred_fallthru
      _
  $region6: #{cossm_forward.1} parent=0 // loop_footer
    %s23 = sadd.s32 1, %s19
  $region7: #{cossm_forward.1} parent=0 // loop_footer_branch
    %18 = sbr.rel target = $region3
  $region8: #{cossm_forward.1} parent=0 // loop_exit
    _

</llo_original>
